<compile_context>
chip_gen: v7x
topology: tpu7x:2x2x1
jax: 0.10.0
libtpu: 0.0.40
codegen_flags: <defaults>
</compile_context>

<pallas_src>
import functools

import jax
import jax.numpy as jnp
from jax import lax
from jax.experimental import pallas as pl
from jax.experimental.pallas import tpu as pltpu

EPS = 1e-6  # norm_layer = partial(nn.LayerNorm, eps=1e-6)


def _layernorm(x, w, b):
    # PyTorch LayerNorm: biased variance, eps inside sqrt.
    mu = jnp.mean(x, axis=-1, keepdims=True)
    var = jnp.mean(jnp.square(x - mu), axis=-1, keepdims=True)
    return (x - mu) * lax.rsqrt(var + EPS) * w + b


def _erf(x):
    # Abramowitz & Stegun 7.1.26, |abs err| < 1.5e-7 (~f32 eps); matches exact GELU
    # (PyTorch nn.GELU default) to float32 precision.  Guaranteed Mosaic lowering.
    a1, a2, a3, a4, a5 = 0.254829592, -0.284496736, 1.421413741, -1.453152027, 1.061405429
    p = 0.3275911
    s = jnp.where(x >= 0.0, 1.0, -1.0)
    ax = jnp.abs(x)
    t = 1.0 / (1.0 + p * ax)
    poly = ((((a5 * t + a4) * t + a3) * t + a2) * t + a1) * t
    return s * (1.0 - poly * jnp.exp(-ax * ax))


def _gelu_exact(x):
    return 0.5 * x * (1.0 + _erf(x * 0.7071067811865476))


def stack_kernel(x_ref, mask_ref,
                 ln1w_ref, ln1b_ref, wqkv_ref, bqkv_ref, wproj_ref, bproj_ref,
                 ln2w_ref, ln2b_ref, w1_ref, b1_ref, w2_ref, b2_ref,
                 normw_ref, normb_ref,
                 o_ref, acc_ref, ctx_ref, *, num_heads):
    layer = pl.program_id(1)
    Bt, N, C = x_ref.shape
    D = C // num_heads
    R = Bt * N

    # Load the input activation into the resident VMEM accumulator at layer 0.
    @pl.when(layer == 0)
    def _():
        acc_ref[...] = x_ref[...].reshape(R, C).astype(jnp.float32)

    x = acc_ref[...]                       # (Bt*N, C) f32, resident across the depth axis

    # ---- Attention branch (pre-norm) ----
    h = _layernorm(x, ln1w_ref[0], ln1b_ref[0])                               # (R, C) f32
    qkv = jnp.dot(h.astype(jnp.bfloat16), wqkv_ref[0],
                  preferred_element_type=jnp.float32)                         # (R, 3C) f32
    qkv = qkv + bqkv_ref[0]

    # Scores / softmax / AV per sample & head; context staged into ctx_ref (no per-head proj).
    for bi in range(Bt):
        r0 = bi * N
        mask_b = mask_ref[bi]                                   # (1, N), broadcasts over queries
        for hd in range(num_heads):
            q_h = qkv[r0:r0 + N, hd * D:(hd + 1) * D].astype(jnp.bfloat16)   # scale folded in W_q
            k_h = qkv[r0:r0 + N, C + hd * D:C + (hd + 1) * D].astype(jnp.bfloat16)
            v_h = qkv[r0:r0 + N, 2 * C + hd * D:2 * C + (hd + 1) * D].astype(jnp.bfloat16)
            s = lax.dot_general(q_h, k_h, (((1,), (1,)), ((), ())),
                                preferred_element_type=jnp.float32)          # (N, N) = q @ k^T
            s = s + mask_b
            s = s - jnp.max(s, axis=-1, keepdims=True)
            p = jnp.exp(s)
            p = p * pl.reciprocal(jnp.sum(p, axis=-1, keepdims=True), approx=True)
            ctx = jnp.dot(p.astype(jnp.bfloat16), v_h,
                          preferred_element_type=jnp.float32)                # (N, D)
            ctx_ref[r0:r0 + N, hd * D:(hd + 1) * D] = ctx.astype(jnp.bfloat16)

    # Single full-width output projection (K = C) over the whole batch block.
    attn = jnp.dot(ctx_ref[...], wproj_ref[0], preferred_element_type=jnp.float32)
    attn = attn + bproj_ref[0]
    # attn_drop / proj_drop / drop_path are identity (rates are 0.0 by default).
    x = x + attn

    # ---- MLP branch (pre-norm) ----
    h2 = _layernorm(x, ln2w_ref[0], ln2b_ref[0])
    h2 = jnp.dot(h2.astype(jnp.bfloat16), w1_ref[0], preferred_element_type=jnp.float32)
    h2 = h2 + b1_ref[0]
    h2 = _gelu_exact(h2)
    h2 = jnp.dot(h2.astype(jnp.bfloat16), w2_ref[0], preferred_element_type=jnp.float32)
    h2 = h2 + b2_ref[0]
    x = x + h2

    acc_ref[...] = x

    # Final LayerNorm epilogue; output block is only written after the last layer.
    @pl.when(layer == pl.num_programs(1) - 1)
    def _():
        y = _layernorm(x, normw_ref[...], normb_ref[...])
        o_ref[...] = y.reshape(Bt, N, C).astype(o_ref.dtype)


def _pick_batch_block(B, N, C, H, act_budget_bytes=8 * 1024 * 1024):
    # Largest divisor of B whose resident/transient activations fit a modest budget,
    # leaving most of VMEM for the double-buffered per-layer weight stream.
    per_sample = N * (4 * C + 2 * C + 4 * 3 * C + 4 * H)   # acc + ctx + qkv + mlp hidden (rough)
    cap = max(1, act_budget_bytes // max(per_sample, 1))
    bt = 1
    for d in range(1, B + 1):
        if B % d == 0 and d <= cap:
            bt = d
    return bt


def video_transformer_forward(x, video_mask, params, *, num_heads,
                              batch_block=None, vmem_limit_bytes=None):
    # register_blk / register_hook path is training-time introspection only; omitted.
    B, N, C = x.shape
    blocks = params["blocks"]
    depth = len(blocks)
    assert C % num_heads == 0
    D = C // num_heads
    H = blocks[0]["w1"].shape[-1]
    scale = D ** -0.5

    Bt = batch_block or _pick_batch_block(B, N, C, H)
    assert B % Bt == 0

    if vmem_limit_bytes is None:
        try:
            # ~75% of physical VMEM: ~96 MiB on v5e/v6e, ~48 MiB on v7x.
            vmem_limit_bytes = int(pltpu.get_tpu_info().vmem_capacity_bytes * 3 // 4)
        except Exception:
            vmem_limit_bytes = 48 * 1024 * 1024

    def stack(name):
        return jnp.stack([blk[name] for blk in blocks], axis=0)

    # Fold the softmax scale into the Q slice of the QKV projection (free VPU saving).
    qscale = jnp.concatenate([jnp.full((C,), scale, jnp.float32),
                              jnp.ones((2 * C,), jnp.float32)], axis=0)
    ln1w, ln1b = stack("ln1w"), stack("ln1b")                              # (depth, 1, C) f32
    ln2w, ln2b = stack("ln2w"), stack("ln2b")
    wqkv = (stack("wqkv") * qscale[None, None, :]).astype(jnp.bfloat16)    # (depth, C, 3C)
    bqkv = stack("bqkv") * qscale[None, None, :]                           # (depth, 1, 3C) f32
    wproj = stack("wproj").astype(jnp.bfloat16)                            # (depth, C, C)
    bproj = stack("bproj")                                                 # (depth, 1, C)
    w1 = stack("w1").astype(jnp.bfloat16)                                  # (depth, C, H)
    b1 = stack("b1")
    w2 = stack("w2").astype(jnp.bfloat16)                                  # (depth, H, C)
    b2 = stack("b2")

    # Additive mask, torch masked_fill semantics: ==0 -> -1e4, ==1 -> 0, else pass through.
    m = video_mask.astype(jnp.float32)
    mask_add = jnp.where(m == 0.0, -10000.0, jnp.where(m == 1.0, 0.0, m)).reshape(B, 1, N)

    def per_layer(arr):
        return pl.BlockSpec((1,) + arr.shape[1:],
                            lambda b, l, nd=arr.ndim: (l,) + (0,) * (nd - 1))

    in_specs = [
        pl.BlockSpec((Bt, N, C), lambda b, l: (b, 0, 0)),     # x (consumed at layer 0 only)
        pl.BlockSpec((Bt, 1, N), lambda b, l: (b, 0, 0)),     # additive attention mask
        per_layer(ln1w), per_layer(ln1b),
        per_layer(wqkv), per_layer(bqkv),
        per_layer(wproj), per_layer(bproj),
        per_layer(ln2w), per_layer(ln2b),
        per_layer(w1), per_layer(b1),
        per_layer(w2), per_layer(b2),
        pl.BlockSpec((1, C), lambda b, l: (0, 0)),            # final norm w
        pl.BlockSpec((1, C), lambda b, l: (0, 0)),            # final norm b
    ]

    return pl.pallas_call(
        functools.partial(stack_kernel, num_heads=num_heads),
        out_shape=jax.ShapeDtypeStruct((B, N, C), x.dtype),
        grid=(B // Bt, depth),
        in_specs=in_specs,
        out_specs=pl.BlockSpec((Bt, N, C), lambda b, l: (b, 0, 0)),
        scratch_shapes=[pltpu.VMEM((Bt * N, C), jnp.float32),     # resident activation
                        pltpu.VMEM((Bt * N, C), jnp.bfloat16)],   # per-head context staging
        compiler_params=pltpu.CompilerParams(
            dimension_semantics=("parallel", "arbitrary"),
            vmem_limit_bytes=vmem_limit_bytes),
    )(x, mask_add,
      ln1w, ln1b, wqkv, bqkv, wproj, bproj,
      ln2w, ln2b, w1, b1, w2, b2,
      params["norm_w"], params["norm_b"])


def init_params(key, *, embed_dim, depth, mlp_ratio):
    C = embed_dim
    H = int(C * mlp_ratio)

    def trunc_normal(k, shape, std=0.02):
        # trunc_normal_(std=0.02): truncated at +/- 2 std
        return std * jax.random.truncated_normal(k, -2.0, 2.0, shape, jnp.float32)

    blocks = []
    for i in range(depth):
        k = jax.random.fold_in(key, i)
        ks = jax.random.split(k, 4)
        blocks.append(dict(
            ln1w=jnp.ones((1, C), jnp.float32), ln1b=jnp.zeros((1, C), jnp.float32),
            wqkv=trunc_normal(ks[0], (C, 3 * C)), bqkv=jnp.zeros((1, 3 * C), jnp.float32),
            wproj=trunc_normal(ks[1], (C, C)), bproj=jnp.zeros((1, C), jnp.float32),
            ln2w=jnp.ones((1, C), jnp.float32), ln2b=jnp.zeros((1, C), jnp.float32),
            w1=trunc_normal(ks[2], (C, H)), b1=jnp.zeros((1, H), jnp.float32),
            w2=trunc_normal(ks[3], (H, C)), b2=jnp.zeros((1, C), jnp.float32),
        ))
    return dict(blocks=blocks,
                norm_w=jnp.ones((1, C), jnp.float32),
                norm_b=jnp.zeros((1, C), jnp.float32))


if __name__ == "__main__":
    B, N, C = 2, 8, 32
    NUM_HEADS = 4
    DEPTH = 2
    MLP_RATIO = 4.0

    key = jax.random.PRNGKey(0)
    kx, kp = jax.random.split(key)
    x = jax.random.normal(kx, (B, N, C), jnp.float32)
    video_mask = jnp.ones((B, N), jnp.float32).at[1, -2:].set(0.0)  # pad out last 2 tokens of sample 1

    params = init_params(kp, embed_dim=C, depth=DEPTH, mlp_ratio=MLP_RATIO)

    out = video_transformer_forward(x, video_mask, params, num_heads=NUM_HEADS)
    out = jax.block_until_ready(out)
    assert out.shape == (B, N, C) and out.dtype == jnp.float32
    assert bool(jnp.all(jnp.isfinite(out)))
    print("KERNEL_OK")
</pallas_src>

<mosaic_0001>
module attributes {stable_mosaic.version = 11 : i64} {
  func.func @stack_kernel(%arg0: i32, %arg1: i32, %arg2: memref<2x8x32xf32, #tpu.memory_space<vmem>>, %arg3: memref<2x1x8xf32, #tpu.memory_space<vmem>>, %arg4: memref<1x1x32xf32, #tpu.memory_space<vmem>>, %arg5: memref<1x1x32xf32, #tpu.memory_space<vmem>>, %arg6: memref<1x32x96xbf16, #tpu.memory_space<vmem>>, %arg7: memref<1x1x96xf32, #tpu.memory_space<vmem>>, %arg8: memref<1x32x32xbf16, #tpu.memory_space<vmem>>, %arg9: memref<1x1x32xf32, #tpu.memory_space<vmem>>, %arg10: memref<1x1x32xf32, #tpu.memory_space<vmem>>, %arg11: memref<1x1x32xf32, #tpu.memory_space<vmem>>, %arg12: memref<1x32x128xbf16, #tpu.memory_space<vmem>>, %arg13: memref<1x1x128xf32, #tpu.memory_space<vmem>>, %arg14: memref<1x128x32xbf16, #tpu.memory_space<vmem>>, %arg15: memref<1x1x32xf32, #tpu.memory_space<vmem>>, %arg16: memref<1x32xf32, #tpu.memory_space<vmem>>, %arg17: memref<1x32xf32, #tpu.memory_space<vmem>>, %arg18: memref<2x8x32xf32, #tpu.memory_space<vmem>>, %arg19: memref<16x32xf32, #tpu.memory_space<vmem>>, %arg20: memref<16x32xbf16, #tpu.memory_space<vmem>>) attributes {dimension_semantics = [#tpu.dimension_semantics<parallel>, #tpu.dimension_semantics<arbitrary>], iteration_bounds = array<i64: 1, 2>, scalar_prefetch = 0 : i64, scratch_operands = 2 : i64, tpu.core_type = #tpu.core_type<tc>, window_params = [{transform_indices = @transform_0, window_bounds = array<i64: 2, 8, 32>}, {transform_indices = @transform_1, window_bounds = array<i64: 2, 1, 8>}, {transform_indices = @transform_2, window_bounds = array<i64: 1, 1, 32>}, {transform_indices = @transform_3, window_bounds = array<i64: 1, 1, 32>}, {transform_indices = @transform_4, window_bounds = array<i64: 1, 32, 96>}, {transform_indices = @transform_5, window_bounds = array<i64: 1, 1, 96>}, {transform_indices = @transform_6, window_bounds = array<i64: 1, 32, 32>}, {transform_indices = @transform_7, window_bounds = array<i64: 1, 1, 32>}, {transform_indices = @transform_8, window_bounds = array<i64: 1, 1, 32>}, {transform_indices = @transform_9, window_bounds = array<i64: 1, 1, 32>}, {transform_indices = @transform_10, window_bounds = array<i64: 1, 32, 128>}, {transform_indices = @transform_11, window_bounds = array<i64: 1, 1, 128>}, {transform_indices = @transform_12, window_bounds = array<i64: 1, 128, 32>}, {transform_indices = @transform_13, window_bounds = array<i64: 1, 1, 32>}, {pipeline_mode = #tpu.pipeline_mode<synchronous>, transform_indices = @transform_14, window_bounds = array<i64: 1, 32>}, {pipeline_mode = #tpu.pipeline_mode<synchronous>, transform_indices = @transform_15, window_bounds = array<i64: 1, 32>}, {transform_indices = @transform_16, window_bounds = array<i64: 2, 8, 32>}]} {
    %c0_i32 = arith.constant 0 : i32
    %0 = arith.cmpi eq, %arg1, %c0_i32 : i32
    %1 = arith.extui %0 : i1 to i32
    %c0_i32_0 = arith.constant 0 : i32
    %2 = arith.cmpi ne, %1, %c0_i32_0 : i32
    scf.if %2 {
      %c0_122 = arith.constant 0 : index
      %c0_123 = arith.constant 0 : index
      %c0_124 = arith.constant 0 : index
      %323 = vector.load %arg2[%c0_122, %c0_123, %c0_124] : memref<2x8x32xf32, #tpu.memory_space<vmem>>, vector<2x8x32xf32>
      %324 = vector.shape_cast %323 : vector<2x8x32xf32> to vector<16x32xf32>
      %c0_125 = arith.constant 0 : index
      %c0_126 = arith.constant 0 : index
      %325 = vector.load %arg19[%c0_125, %c0_126] : memref<16x32xf32, #tpu.memory_space<vmem>>, vector<16x32xf32>
      tpu.vector_store %arg19[%c0_125, %c0_126], %324 {strides = array<i32>} : memref<16x32xf32, #tpu.memory_space<vmem>>, vector<16x32xf32>,
    } else {
    }
    %c0 = arith.constant 0 : index
    %c0_1 = arith.constant 0 : index
    %3 = vector.load %arg19[%c0, %c0_1] : memref<16x32xf32, #tpu.memory_space<vmem>>, vector<16x32xf32>
    %c0_2 = arith.constant 0 : index
    %c0_3 = arith.constant 0 : index
    %c0_4 = arith.constant 0 : index
    %4 = vector.load %arg4[%c0_2, %c0_3, %c0_4] : memref<1x1x32xf32, #tpu.memory_space<vmem>>, vector<1x1x32xf32>
    %5 = vector.shape_cast %4 : vector<1x1x32xf32> to vector<1x32xf32>
    %c0_5 = arith.constant 0 : index
    %c0_6 = arith.constant 0 : index
    %c0_7 = arith.constant 0 : index
    %6 = vector.load %arg5[%c0_5, %c0_6, %c0_7] : memref<1x1x32xf32, #tpu.memory_space<vmem>>, vector<1x1x32xf32>
    %7 = vector.shape_cast %6 : vector<1x1x32xf32> to vector<1x32xf32>
    %cst = arith.constant dense<0.000000e+00> : vector<16xf32>
    %8 = vector.multi_reduction <add>, %3, %cst [1] : vector<16x32xf32> to vector<16xf32>
    %9 = vector.shape_cast %8 : vector<16xf32> to vector<16x1xf32>
    %cst_8 = arith.constant 3.200000e+01 : f32
    %10 = vector.broadcast %cst_8 : f32 to vector<16x1xf32>
    %11 = arith.divf %9, %10 : vector<16x1xf32>
    %12 = vector.broadcast %11 : vector<16x1xf32> to vector<16x32xf32>
    %13 = arith.subf %3, %12 : vector<16x32xf32>
    %14 = arith.mulf %13, %13 : vector<16x32xf32>
    %cst_9 = arith.constant dense<0.000000e+00> : vector<16xf32>
    %15 = vector.multi_reduction <add>, %14, %cst_9 [1] : vector<16x32xf32> to vector<16xf32>
    %16 = vector.shape_cast %15 : vector<16xf32> to vector<16x1xf32>
    %cst_10 = arith.constant 3.200000e+01 : f32
    %17 = vector.broadcast %cst_10 : f32 to vector<16x1xf32>
    %18 = arith.divf %16, %17 : vector<16x1xf32>
    %19 = vector.broadcast %11 : vector<16x1xf32> to vector<16x32xf32>
    %20 = arith.subf %3, %19 : vector<16x32xf32>
    %cst_11 = arith.constant 9.99999997E-7 : f32
    %21 = vector.broadcast %cst_11 : f32 to vector<16x1xf32>
    %22 = arith.addf %18, %21 : vector<16x1xf32>
    %23 = math.rsqrt %22 : vector<16x1xf32>
    %24 = vector.broadcast %23 : vector<16x1xf32> to vector<16x32xf32>
    %25 = arith.mulf %20, %24 : vector<16x32xf32>
    %26 = vector.broadcast %5 : vector<1x32xf32> to vector<16x32xf32>
    %27 = arith.mulf %25, %26 : vector<16x32xf32>
    %28 = vector.broadcast %7 : vector<1x32xf32> to vector<16x32xf32>
    %29 = arith.addf %27, %28 : vector<16x32xf32>
    %30 = arith.truncf %29 : vector<16x32xf32> to vector<16x32xbf16>
    %c0_12 = arith.constant 0 : index
    %c0_13 = arith.constant 0 : index
    %c0_14 = arith.constant 0 : index
    %31 = vector.load %arg6[%c0_12, %c0_13, %c0_14] : memref<1x32x96xbf16, #tpu.memory_space<vmem>>, vector<1x32x96xbf16>
    %32 = vector.shape_cast %31 : vector<1x32x96xbf16> to vector<32x96xbf16>
    %cst_15 = arith.constant dense<0.000000e+00> : vector<16x96xf32>
    %33 = tpu.matmul %30, %32, %cst_15 {dimension_numbers = #tpu.dot_dimension_numbers<[1], [0], [0], [1], [0, 0, 1, 1], [], []>} : vector<16x32xbf16>, vector<32x96xbf16>, vector<16x96xf32> -> vector<16x96xf32>
    %c0_16 = arith.constant 0 : index
    %c0_17 = arith.constant 0 : index
    %c0_18 = arith.constant 0 : index
    %34 = vector.load %arg7[%c0_16, %c0_17, %c0_18] : memref<1x1x96xf32, #tpu.memory_space<vmem>>, vector<1x1x96xf32>
    %35 = vector.shape_cast %34 : vector<1x1x96xf32> to vector<1x96xf32>
    %36 = vector.broadcast %35 : vector<1x96xf32> to vector<16x96xf32>
    %37 = arith.addf %33, %36 : vector<16x96xf32>
    %c0_19 = arith.constant 0 : index
    %c0_20 = arith.constant 0 : index
    %c0_21 = arith.constant 0 : index
    %38 = vector.load %arg3[%c0_19, %c0_20, %c0_21] : memref<2x1x8xf32, #tpu.memory_space<vmem>>, vector<1x1x8xf32>
    %39 = vector.shape_cast %38 : vector<1x1x8xf32> to vector<1x8xf32>
    %40 = vector.extract_strided_slice %37 {offsets = [0, 0], sizes = [8, 8], strides = [1, 1]} : vector<16x96xf32> to vector<8x8xf32>
    %41 = arith.truncf %40 : vector<8x8xf32> to vector<8x8xbf16>
    %42 = vector.extract_strided_slice %37 {offsets = [0, 32], sizes = [8, 8], strides = [1, 1]} : vector<16x96xf32> to vector<8x8xf32>
    %43 = arith.truncf %42 : vector<8x8xf32> to vector<8x8xbf16>
    %44 = vector.extract_strided_slice %37 {offsets = [0, 64], sizes = [8, 8], strides = [1, 1]} : vector<16x96xf32> to vector<8x8xf32>
    %45 = arith.truncf %44 : vector<8x8xf32> to vector<8x8xbf16>
    %cst_22 = arith.constant dense<0.000000e+00> : vector<8x8xf32>
    %46 = tpu.matmul %41, %43, %cst_22 {dimension_numbers = #tpu.dot_dimension_numbers<[1], [1], [0], [0], [0, 0, 1, 0], [], []>} : vector<8x8xbf16>, vector<8x8xbf16>, vector<8x8xf32> -> vector<8x8xf32>
    %47 = vector.broadcast %39 : vector<1x8xf32> to vector<8x8xf32>
    %48 = arith.addf %46, %47 : vector<8x8xf32>
    %cst_23 = arith.constant dense<0xFF800000> : vector<8xf32>
    %49 = vector.multi_reduction <maximumf>, %48, %cst_23 [1] : vector<8x8xf32> to vector<8xf32>
    %50 = vector.shape_cast %49 : vector<8xf32> to vector<8x1xf32>
    %51 = vector.broadcast %50 : vector<8x1xf32> to vector<8x8xf32>
    %52 = arith.subf %48, %51 : vector<8x8xf32>
    %53 = math.exp %52 : vector<8x8xf32>
    %cst_24 = arith.constant dense<0.000000e+00> : vector<8xf32>
    %54 = vector.multi_reduction <add>, %53, %cst_24 [1] : vector<8x8xf32> to vector<8xf32>
    %55 = vector.shape_cast %54 : vector<8xf32> to vector<8x1xf32>
    %56 = tpu.reciprocal %55 {approx = true} : vector<8x1xf32> -> vector<8x1xf32>
    %57 = vector.broadcast %56 : vector<8x1xf32> to vector<8x8xf32>
    %58 = arith.mulf %53, %57 : vector<8x8xf32>
    %59 = arith.truncf %58 : vector<8x8xf32> to vector<8x8xbf16>
    %cst_25 = arith.constant dense<0.000000e+00> : vector<8x8xf32>
    %60 = tpu.matmul %59, %45, %cst_25 {dimension_numbers = #tpu.dot_dimension_numbers<[1], [0], [0], [1], [0, 0, 1, 1], [], []>} : vector<8x8xbf16>, vector<8x8xbf16>, vector<8x8xf32> -> vector<8x8xf32>
    %61 = arith.truncf %60 : vector<8x8xf32> to vector<8x8xbf16>
    %c0_26 = arith.constant 0 : index
    %c0_27 = arith.constant 0 : index
    %62 = vector.load %arg20[%c0_26, %c0_27] : memref<16x32xbf16, #tpu.memory_space<vmem>>, vector<8x8xbf16>
    tpu.vector_store %arg20[%c0_26, %c0_27], %61 {strides = array<i32>} : memref<16x32xbf16, #tpu.memory_space<vmem>>, vector<8x8xbf16>,
    %63 = vector.extract_strided_slice %37 {offsets = [0, 8], sizes = [8, 8], strides = [1, 1]} : vector<16x96xf32> to vector<8x8xf32>
    %64 = arith.truncf %63 : vector<8x8xf32> to vector<8x8xbf16>
    %65 = vector.extract_strided_slice %37 {offsets = [0, 40], sizes = [8, 8], strides = [1, 1]} : vector<16x96xf32> to vector<8x8xf32>
    %66 = arith.truncf %65 : vector<8x8xf32> to vector<8x8xbf16>
    %67 = vector.extract_strided_slice %37 {offsets = [0, 72], sizes = [8, 8], strides = [1, 1]} : vector<16x96xf32> to vector<8x8xf32>
    %68 = arith.truncf %67 : vector<8x8xf32> to vector<8x8xbf16>
    %cst_28 = arith.constant dense<0.000000e+00> : vector<8x8xf32>
    %69 = tpu.matmul %64, %66, %cst_28 {dimension_numbers = #tpu.dot_dimension_numbers<[1], [1], [0], [0], [0, 0, 1, 0], [], []>} : vector<8x8xbf16>, vector<8x8xbf16>, vector<8x8xf32> -> vector<8x8xf32>
    %70 = vector.broadcast %39 : vector<1x8xf32> to vector<8x8xf32>
    %71 = arith.addf %69, %70 : vector<8x8xf32>
    %cst_29 = arith.constant dense<0xFF800000> : vector<8xf32>
    %72 = vector.multi_reduction <maximumf>, %71, %cst_29 [1] : vector<8x8xf32> to vector<8xf32>
    %73 = vector.shape_cast %72 : vector<8xf32> to vector<8x1xf32>
    %74 = vector.broadcast %73 : vector<8x1xf32> to vector<8x8xf32>
    %75 = arith.subf %71, %74 : vector<8x8xf32>
    %76 = math.exp %75 : vector<8x8xf32>
    %cst_30 = arith.constant dense<0.000000e+00> : vector<8xf32>
    %77 = vector.multi_reduction <add>, %76, %cst_30 [1] : vector<8x8xf32> to vector<8xf32>
    %78 = vector.shape_cast %77 : vector<8xf32> to vector<8x1xf32>
    %79 = tpu.reciprocal %78 {approx = true} : vector<8x1xf32> -> vector<8x1xf32>
    %80 = vector.broadcast %79 : vector<8x1xf32> to vector<8x8xf32>
    %81 = arith.mulf %76, %80 : vector<8x8xf32>
    %82 = arith.truncf %81 : vector<8x8xf32> to vector<8x8xbf16>
    %cst_31 = arith.constant dense<0.000000e+00> : vector<8x8xf32>
    %83 = tpu.matmul %82, %68, %cst_31 {dimension_numbers = #tpu.dot_dimension_numbers<[1], [0], [0], [1], [0, 0, 1, 1], [], []>} : vector<8x8xbf16>, vector<8x8xbf16>, vector<8x8xf32> -> vector<8x8xf32>
    %84 = arith.truncf %83 : vector<8x8xf32> to vector<8x8xbf16>
    %c0_32 = arith.constant 0 : index
    %c8 = arith.constant 8 : index
    %85 = vector.load %arg20[%c0_32, %c8] : memref<16x32xbf16, #tpu.memory_space<vmem>>, vector<8x8xbf16>
    tpu.vector_store %arg20[%c0_32, %c8], %84 {strides = array<i32>} : memref<16x32xbf16, #tpu.memory_space<vmem>>, vector<8x8xbf16>,
    %86 = vector.extract_strided_slice %37 {offsets = [0, 16], sizes = [8, 8], strides = [1, 1]} : vector<16x96xf32> to vector<8x8xf32>
    %87 = arith.truncf %86 : vector<8x8xf32> to vector<8x8xbf16>
    %88 = vector.extract_strided_slice %37 {offsets = [0, 48], sizes = [8, 8], strides = [1, 1]} : vector<16x96xf32> to vector<8x8xf32>
    %89 = arith.truncf %88 : vector<8x8xf32> to vector<8x8xbf16>
    %90 = vector.extract_strided_slice %37 {offsets = [0, 80], sizes = [8, 8], strides = [1, 1]} : vector<16x96xf32> to vector<8x8xf32>
    %91 = arith.truncf %90 : vector<8x8xf32> to vector<8x8xbf16>
    %cst_33 = arith.constant dense<0.000000e+00> : vector<8x8xf32>
    %92 = tpu.matmul %87, %89, %cst_33 {dimension_numbers = #tpu.dot_dimension_numbers<[1], [1], [0], [0], [0, 0, 1, 0], [], []>} : vector<8x8xbf16>, vector<8x8xbf16>, vector<8x8xf32> -> vector<8x8xf32>
    %93 = vector.broadcast %39 : vector<1x8xf32> to vector<8x8xf32>
    %94 = arith.addf %92, %93 : vector<8x8xf32>
    %cst_34 = arith.constant dense<0xFF800000> : vector<8xf32>
    %95 = vector.multi_reduction <maximumf>, %94, %cst_34 [1] : vector<8x8xf32> to vector<8xf32>
    %96 = vector.shape_cast %95 : vector<8xf32> to vector<8x1xf32>
    %97 = vector.broadcast %96 : vector<8x1xf32> to vector<8x8xf32>
    %98 = arith.subf %94, %97 : vector<8x8xf32>
    %99 = math.exp %98 : vector<8x8xf32>
    %cst_35 = arith.constant dense<0.000000e+00> : vector<8xf32>
    %100 = vector.multi_reduction <add>, %99, %cst_35 [1] : vector<8x8xf32> to vector<8xf32>
    %101 = vector.shape_cast %100 : vector<8xf32> to vector<8x1xf32>
    %102 = tpu.reciprocal %101 {approx = true} : vector<8x1xf32> -> vector<8x1xf32>
    %103 = vector.broadcast %102 : vector<8x1xf32> to vector<8x8xf32>
    %104 = arith.mulf %99, %103 : vector<8x8xf32>
    %105 = arith.truncf %104 : vector<8x8xf32> to vector<8x8xbf16>
    %cst_36 = arith.constant dense<0.000000e+00> : vector<8x8xf32>
    %106 = tpu.matmul %105, %91, %cst_36 {dimension_numbers = #tpu.dot_dimension_numbers<[1], [0], [0], [1], [0, 0, 1, 1], [], []>} : vector<8x8xbf16>, vector<8x8xbf16>, vector<8x8xf32> -> vector<8x8xf32>
    %107 = arith.truncf %106 : vector<8x8xf32> to vector<8x8xbf16>
    %c0_37 = arith.constant 0 : index
    %c16 = arith.constant 16 : index
    %108 = vector.load %arg20[%c0_37, %c16] : memref<16x32xbf16, #tpu.memory_space<vmem>>, vector<8x8xbf16>
    tpu.vector_store %arg20[%c0_37, %c16], %107 {strides = array<i32>} : memref<16x32xbf16, #tpu.memory_space<vmem>>, vector<8x8xbf16>,
    %109 = vector.extract_strided_slice %37 {offsets = [0, 24], sizes = [8, 8], strides = [1, 1]} : vector<16x96xf32> to vector<8x8xf32>
    %110 = arith.truncf %109 : vector<8x8xf32> to vector<8x8xbf16>
    %111 = vector.extract_strided_slice %37 {offsets = [0, 56], sizes = [8, 8], strides = [1, 1]} : vector<16x96xf32> to vector<8x8xf32>
    %112 = arith.truncf %111 : vector<8x8xf32> to vector<8x8xbf16>
    %113 = vector.extract_strided_slice %37 {offsets = [0, 88], sizes = [8, 8], strides = [1, 1]} : vector<16x96xf32> to vector<8x8xf32>
    %114 = arith.truncf %113 : vector<8x8xf32> to vector<8x8xbf16>
    %cst_38 = arith.constant dense<0.000000e+00> : vector<8x8xf32>
    %115 = tpu.matmul %110, %112, %cst_38 {dimension_numbers = #tpu.dot_dimension_numbers<[1], [1], [0], [0], [0, 0, 1, 0], [], []>} : vector<8x8xbf16>, vector<8x8xbf16>, vector<8x8xf32> -> vector<8x8xf32>
    %116 = vector.broadcast %39 : vector<1x8xf32> to vector<8x8xf32>
    %117 = arith.addf %115, %116 : vector<8x8xf32>
    %cst_39 = arith.constant dense<0xFF800000> : vector<8xf32>
    %118 = vector.multi_reduction <maximumf>, %117, %cst_39 [1] : vector<8x8xf32> to vector<8xf32>
    %119 = vector.shape_cast %118 : vector<8xf32> to vector<8x1xf32>
    %120 = vector.broadcast %119 : vector<8x1xf32> to vector<8x8xf32>
    %121 = arith.subf %117, %120 : vector<8x8xf32>
    %122 = math.exp %121 : vector<8x8xf32>
    %cst_40 = arith.constant dense<0.000000e+00> : vector<8xf32>
    %123 = vector.multi_reduction <add>, %122, %cst_40 [1] : vector<8x8xf32> to vector<8xf32>
    %124 = vector.shape_cast %123 : vector<8xf32> to vector<8x1xf32>
    %125 = tpu.reciprocal %124 {approx = true} : vector<8x1xf32> -> vector<8x1xf32>
    %126 = vector.broadcast %125 : vector<8x1xf32> to vector<8x8xf32>
    %127 = arith.mulf %122, %126 : vector<8x8xf32>
    %128 = arith.truncf %127 : vector<8x8xf32> to vector<8x8xbf16>
    %cst_41 = arith.constant dense<0.000000e+00> : vector<8x8xf32>
    %129 = tpu.matmul %128, %114, %cst_41 {dimension_numbers = #tpu.dot_dimension_numbers<[1], [0], [0], [1], [0, 0, 1, 1], [], []>} : vector<8x8xbf16>, vector<8x8xbf16>, vector<8x8xf32> -> vector<8x8xf32>
    %130 = arith.truncf %129 : vector<8x8xf32> to vector<8x8xbf16>
    %c0_42 = arith.constant 0 : index
    %c24 = arith.constant 24 : index
    %131 = vector.load %arg20[%c0_42, %c24] : memref<16x32xbf16, #tpu.memory_space<vmem>>, vector<8x8xbf16>
    tpu.vector_store %arg20[%c0_42, %c24], %130 {strides = array<i32>} : memref<16x32xbf16, #tpu.memory_space<vmem>>, vector<8x8xbf16>,
    %c1 = arith.constant 1 : index
    %c0_43 = arith.constant 0 : index
    %c0_44 = arith.constant 0 : index
    %132 = vector.load %arg3[%c1, %c0_43, %c0_44] : memref<2x1x8xf32, #tpu.memory_space<vmem>>, vector<1x1x8xf32>
    %133 = vector.shape_cast %132 : vector<1x1x8xf32> to vector<1x8xf32>
    %134 = vector.extract_strided_slice %37 {offsets = [8, 0], sizes = [8, 8], strides = [1, 1]} : vector<16x96xf32> to vector<8x8xf32>
    %135 = arith.truncf %134 : vector<8x8xf32> to vector<8x8xbf16>
    %136 = vector.extract_strided_slice %37 {offsets = [8, 32], sizes = [8, 8], strides = [1, 1]} : vector<16x96xf32> to vector<8x8xf32>
    %137 = arith.truncf %136 : vector<8x8xf32> to vector<8x8xbf16>
    %138 = vector.extract_strided_slice %37 {offsets = [8, 64], sizes = [8, 8], strides = [1, 1]} : vector<16x96xf32> to vector<8x8xf32>
    %139 = arith.truncf %138 : vector<8x8xf32> to vector<8x8xbf16>
    %cst_45 = arith.constant dense<0.000000e+00> : vector<8x8xf32>
    %140 = tpu.matmul %135, %137, %cst_45 {dimension_numbers = #tpu.dot_dimension_numbers<[1], [1], [0], [0], [0, 0, 1, 0], [], []>} : vector<8x8xbf16>, vector<8x8xbf16>, vector<8x8xf32> -> vector<8x8xf32>
    %141 = vector.broadcast %133 : vector<1x8xf32> to vector<8x8xf32>
    %142 = arith.addf %140, %141 : vector<8x8xf32>
    %cst_46 = arith.constant dense<0xFF800000> : vector<8xf32>
    %143 = vector.multi_reduction <maximumf>, %142, %cst_46 [1] : vector<8x8xf32> to vector<8xf32>
    %144 = vector.shape_cast %143 : vector<8xf32> to vector<8x1xf32>
    %145 = vector.broadcast %144 : vector<8x1xf32> to vector<8x8xf32>
    %146 = arith.subf %142, %145 : vector<8x8xf32>
    %147 = math.exp %146 : vector<8x8xf32>
    %cst_47 = arith.constant dense<0.000000e+00> : vector<8xf32>
    %148 = vector.multi_reduction <add>, %147, %cst_47 [1] : vector<8x8xf32> to vector<8xf32>
    %149 = vector.shape_cast %148 : vector<8xf32> to vector<8x1xf32>
    %150 = tpu.reciprocal %149 {approx = true} : vector<8x1xf32> -> vector<8x1xf32>
    %151 = vector.broadcast %150 : vector<8x1xf32> to vector<8x8xf32>
    %152 = arith.mulf %147, %151 : vector<8x8xf32>
    %153 = arith.truncf %152 : vector<8x8xf32> to vector<8x8xbf16>
    %cst_48 = arith.constant dense<0.000000e+00> : vector<8x8xf32>
    %154 = tpu.matmul %153, %139, %cst_48 {dimension_numbers = #tpu.dot_dimension_numbers<[1], [0], [0], [1], [0, 0, 1, 1], [], []>} : vector<8x8xbf16>, vector<8x8xbf16>, vector<8x8xf32> -> vector<8x8xf32>
    %155 = arith.truncf %154 : vector<8x8xf32> to vector<8x8xbf16>
    %c8_49 = arith.constant 8 : index
    %c0_50 = arith.constant 0 : index
    %156 = vector.load %arg20[%c8_49, %c0_50] : memref<16x32xbf16, #tpu.memory_space<vmem>>, vector<8x8xbf16>
    tpu.vector_store %arg20[%c8_49, %c0_50], %155 {strides = array<i32>} : memref<16x32xbf16, #tpu.memory_space<vmem>>, vector<8x8xbf16>,
    %157 = vector.extract_strided_slice %37 {offsets = [8, 8], sizes = [8, 8], strides = [1, 1]} : vector<16x96xf32> to vector<8x8xf32>
    %158 = arith.truncf %157 : vector<8x8xf32> to vector<8x8xbf16>
    %159 = vector.extract_strided_slice %37 {offsets = [8, 40], sizes = [8, 8], strides = [1, 1]} : vector<16x96xf32> to vector<8x8xf32>
    %160 = arith.truncf %159 : vector<8x8xf32> to vector<8x8xbf16>
    %161 = vector.extract_strided_slice %37 {offsets = [8, 72], sizes = [8, 8], strides = [1, 1]} : vector<16x96xf32> to vector<8x8xf32>
    %162 = arith.truncf %161 : vector<8x8xf32> to vector<8x8xbf16>
    %cst_51 = arith.constant dense<0.000000e+00> : vector<8x8xf32>
    %163 = tpu.matmul %158, %160, %cst_51 {dimension_numbers = #tpu.dot_dimension_numbers<[1], [1], [0], [0], [0, 0, 1, 0], [], []>} : vector<8x8xbf16>, vector<8x8xbf16>, vector<8x8xf32> -> vector<8x8xf32>
    %164 = vector.broadcast %133 : vector<1x8xf32> to vector<8x8xf32>
    %165 = arith.addf %163, %164 : vector<8x8xf32>
    %cst_52 = arith.constant dense<0xFF800000> : vector<8xf32>
    %166 = vector.multi_reduction <maximumf>, %165, %cst_52 [1] : vector<8x8xf32> to vector<8xf32>
    %167 = vector.shape_cast %166 : vector<8xf32> to vector<8x1xf32>
    %168 = vector.broadcast %167 : vector<8x1xf32> to vector<8x8xf32>
    %169 = arith.subf %165, %168 : vector<8x8xf32>
    %170 = math.exp %169 : vector<8x8xf32>
    %cst_53 = arith.constant dense<0.000000e+00> : vector<8xf32>
    %171 = vector.multi_reduction <add>, %170, %cst_53 [1] : vector<8x8xf32> to vector<8xf32>
    %172 = vector.shape_cast %171 : vector<8xf32> to vector<8x1xf32>
    %173 = tpu.reciprocal %172 {approx = true} : vector<8x1xf32> -> vector<8x1xf32>
    %174 = vector.broadcast %173 : vector<8x1xf32> to vector<8x8xf32>
    %175 = arith.mulf %170, %174 : vector<8x8xf32>
    %176 = arith.truncf %175 : vector<8x8xf32> to vector<8x8xbf16>
    %cst_54 = arith.constant dense<0.000000e+00> : vector<8x8xf32>
    %177 = tpu.matmul %176, %162, %cst_54 {dimension_numbers = #tpu.dot_dimension_numbers<[1], [0], [0], [1], [0, 0, 1, 1], [], []>} : vector<8x8xbf16>, vector<8x8xbf16>, vector<8x8xf32> -> vector<8x8xf32>
    %178 = arith.truncf %177 : vector<8x8xf32> to vector<8x8xbf16>
    %c8_55 = arith.constant 8 : index
    %c8_56 = arith.constant 8 : index
    %179 = vector.load %arg20[%c8_55, %c8_56] : memref<16x32xbf16, #tpu.memory_space<vmem>>, vector<8x8xbf16>
    tpu.vector_store %arg20[%c8_55, %c8_56], %178 {strides = array<i32>} : memref<16x32xbf16, #tpu.memory_space<vmem>>, vector<8x8xbf16>,
    %180 = vector.extract_strided_slice %37 {offsets = [8, 16], sizes = [8, 8], strides = [1, 1]} : vector<16x96xf32> to vector<8x8xf32>
    %181 = arith.truncf %180 : vector<8x8xf32> to vector<8x8xbf16>
    %182 = vector.extract_strided_slice %37 {offsets = [8, 48], sizes = [8, 8], strides = [1, 1]} : vector<16x96xf32> to vector<8x8xf32>
    %183 = arith.truncf %182 : vector<8x8xf32> to vector<8x8xbf16>
    %184 = vector.extract_strided_slice %37 {offsets = [8, 80], sizes = [8, 8], strides = [1, 1]} : vector<16x96xf32> to vector<8x8xf32>
    %185 = arith.truncf %184 : vector<8x8xf32> to vector<8x8xbf16>
    %cst_57 = arith.constant dense<0.000000e+00> : vector<8x8xf32>
    %186 = tpu.matmul %181, %183, %cst_57 {dimension_numbers = #tpu.dot_dimension_numbers<[1], [1], [0], [0], [0, 0, 1, 0], [], []>} : vector<8x8xbf16>, vector<8x8xbf16>, vector<8x8xf32> -> vector<8x8xf32>
    %187 = vector.broadcast %133 : vector<1x8xf32> to vector<8x8xf32>
    %188 = arith.addf %186, %187 : vector<8x8xf32>
    %cst_58 = arith.constant dense<0xFF800000> : vector<8xf32>
    %189 = vector.multi_reduction <maximumf>, %188, %cst_58 [1] : vector<8x8xf32> to vector<8xf32>
    %190 = vector.shape_cast %189 : vector<8xf32> to vector<8x1xf32>
    %191 = vector.broadcast %190 : vector<8x1xf32> to vector<8x8xf32>
    %192 = arith.subf %188, %191 : vector<8x8xf32>
    %193 = math.exp %192 : vector<8x8xf32>
    %cst_59 = arith.constant dense<0.000000e+00> : vector<8xf32>
    %194 = vector.multi_reduction <add>, %193, %cst_59 [1] : vector<8x8xf32> to vector<8xf32>
    %195 = vector.shape_cast %194 : vector<8xf32> to vector<8x1xf32>
    %196 = tpu.reciprocal %195 {approx = true} : vector<8x1xf32> -> vector<8x1xf32>
    %197 = vector.broadcast %196 : vector<8x1xf32> to vector<8x8xf32>
    %198 = arith.mulf %193, %197 : vector<8x8xf32>
    %199 = arith.truncf %198 : vector<8x8xf32> to vector<8x8xbf16>
    %cst_60 = arith.constant dense<0.000000e+00> : vector<8x8xf32>
    %200 = tpu.matmul %199, %185, %cst_60 {dimension_numbers = #tpu.dot_dimension_numbers<[1], [0], [0], [1], [0, 0, 1, 1], [], []>} : vector<8x8xbf16>, vector<8x8xbf16>, vector<8x8xf32> -> vector<8x8xf32>
    %201 = arith.truncf %200 : vector<8x8xf32> to vector<8x8xbf16>
    %c8_61 = arith.constant 8 : index
    %c16_62 = arith.constant 16 : index
    %202 = vector.load %arg20[%c8_61, %c16_62] : memref<16x32xbf16, #tpu.memory_space<vmem>>, vector<8x8xbf16>
    tpu.vector_store %arg20[%c8_61, %c16_62], %201 {strides = array<i32>} : memref<16x32xbf16, #tpu.memory_space<vmem>>, vector<8x8xbf16>,
    %203 = vector.extract_strided_slice %37 {offsets = [8, 24], sizes = [8, 8], strides = [1, 1]} : vector<16x96xf32> to vector<8x8xf32>
    %204 = arith.truncf %203 : vector<8x8xf32> to vector<8x8xbf16>
    %205 = vector.extract_strided_slice %37 {offsets = [8, 56], sizes = [8, 8], strides = [1, 1]} : vector<16x96xf32> to vector<8x8xf32>
    %206 = arith.truncf %205 : vector<8x8xf32> to vector<8x8xbf16>
    %207 = vector.extract_strided_slice %37 {offsets = [8, 88], sizes = [8, 8], strides = [1, 1]} : vector<16x96xf32> to vector<8x8xf32>
    %208 = arith.truncf %207 : vector<8x8xf32> to vector<8x8xbf16>
    %cst_63 = arith.constant dense<0.000000e+00> : vector<8x8xf32>
    %209 = tpu.matmul %204, %206, %cst_63 {dimension_numbers = #tpu.dot_dimension_numbers<[1], [1], [0], [0], [0, 0, 1, 0], [], []>} : vector<8x8xbf16>, vector<8x8xbf16>, vector<8x8xf32> -> vector<8x8xf32>
    %210 = vector.broadcast %133 : vector<1x8xf32> to vector<8x8xf32>
    %211 = arith.addf %209, %210 : vector<8x8xf32>
    %cst_64 = arith.constant dense<0xFF800000> : vector<8xf32>
    %212 = vector.multi_reduction <maximumf>, %211, %cst_64 [1] : vector<8x8xf32> to vector<8xf32>
    %213 = vector.shape_cast %212 : vector<8xf32> to vector<8x1xf32>
    %214 = vector.broadcast %213 : vector<8x1xf32> to vector<8x8xf32>
    %215 = arith.subf %211, %214 : vector<8x8xf32>
    %216 = math.exp %215 : vector<8x8xf32>
    %cst_65 = arith.constant dense<0.000000e+00> : vector<8xf32>
    %217 = vector.multi_reduction <add>, %216, %cst_65 [1] : vector<8x8xf32> to vector<8xf32>
    %218 = vector.shape_cast %217 : vector<8xf32> to vector<8x1xf32>
    %219 = tpu.reciprocal %218 {approx = true} : vector<8x1xf32> -> vector<8x1xf32>
    %220 = vector.broadcast %219 : vector<8x1xf32> to vector<8x8xf32>
    %221 = arith.mulf %216, %220 : vector<8x8xf32>
    %222 = arith.truncf %221 : vector<8x8xf32> to vector<8x8xbf16>
    %cst_66 = arith.constant dense<0.000000e+00> : vector<8x8xf32>
    %223 = tpu.matmul %222, %208, %cst_66 {dimension_numbers = #tpu.dot_dimension_numbers<[1], [0], [0], [1], [0, 0, 1, 1], [], []>} : vector<8x8xbf16>, vector<8x8xbf16>, vector<8x8xf32> -> vector<8x8xf32>
    %224 = arith.truncf %223 : vector<8x8xf32> to vector<8x8xbf16>
    %c8_67 = arith.constant 8 : index
    %c24_68 = arith.constant 24 : index
    %225 = vector.load %arg20[%c8_67, %c24_68] : memref<16x32xbf16, #tpu.memory_space<vmem>>, vector<8x8xbf16>
    tpu.vector_store %arg20[%c8_67, %c24_68], %224 {strides = array<i32>} : memref<16x32xbf16, #tpu.memory_space<vmem>>, vector<8x8xbf16>,
    %c0_69 = arith.constant 0 : index
    %c0_70 = arith.constant 0 : index
    %226 = vector.load %arg20[%c0_69, %c0_70] : memref<16x32xbf16, #tpu.memory_space<vmem>>, vector<16x32xbf16>
    %c0_71 = arith.constant 0 : index
    %c0_72 = arith.constant 0 : index
    %c0_73 = arith.constant 0 : index
    %227 = vector.load %arg8[%c0_71, %c0_72, %c0_73] : memref<1x32x32xbf16, #tpu.memory_space<vmem>>, vector<1x32x32xbf16>
    %228 = vector.shape_cast %227 : vector<1x32x32xbf16> to vector<32x32xbf16>
    %cst_74 = arith.constant dense<0.000000e+00> : vector<16x32xf32>
    %229 = tpu.matmul %226, %228, %cst_74 {dimension_numbers = #tpu.dot_dimension_numbers<[1], [0], [0], [1], [0, 0, 1, 1], [], []>} : vector<16x32xbf16>, vector<32x32xbf16>, vector<16x32xf32> -> vector<16x32xf32>
    %c0_75 = arith.constant 0 : index
    %c0_76 = arith.constant 0 : index
    %c0_77 = arith.constant 0 : index
    %230 = vector.load %arg9[%c0_75, %c0_76, %c0_77] : memref<1x1x32xf32, #tpu.memory_space<vmem>>, vector<1x1x32xf32>
    %231 = vector.shape_cast %230 : vector<1x1x32xf32> to vector<1x32xf32>
    %232 = vector.broadcast %231 : vector<1x32xf32> to vector<16x32xf32>
    %233 = arith.addf %229, %232 : vector<16x32xf32>
    %234 = arith.addf %3, %233 : vector<16x32xf32>
    %c0_78 = arith.constant 0 : index
    %c0_79 = arith.constant 0 : index
    %c0_80 = arith.constant 0 : index
    %235 = vector.load %arg10[%c0_78, %c0_79, %c0_80] : memref<1x1x32xf32, #tpu.memory_space<vmem>>, vector<1x1x32xf32>
    %236 = vector.shape_cast %235 : vector<1x1x32xf32> to vector<1x32xf32>
    %c0_81 = arith.constant 0 : index
    %c0_82 = arith.constant 0 : index
    %c0_83 = arith.constant 0 : index
    %237 = vector.load %arg11[%c0_81, %c0_82, %c0_83] : memref<1x1x32xf32, #tpu.memory_space<vmem>>, vector<1x1x32xf32>
    %238 = vector.shape_cast %237 : vector<1x1x32xf32> to vector<1x32xf32>
    %cst_84 = arith.constant dense<0.000000e+00> : vector<16xf32>
    %239 = vector.multi_reduction <add>, %234, %cst_84 [1] : vector<16x32xf32> to vector<16xf32>
    %240 = vector.shape_cast %239 : vector<16xf32> to vector<16x1xf32>
    %cst_85 = arith.constant 3.200000e+01 : f32
    %241 = vector.broadcast %cst_85 : f32 to vector<16x1xf32>
    %242 = arith.divf %240, %241 : vector<16x1xf32>
    %243 = vector.broadcast %242 : vector<16x1xf32> to vector<16x32xf32>
    %244 = arith.subf %234, %243 : vector<16x32xf32>
    %245 = arith.mulf %244, %244 : vector<16x32xf32>
    %cst_86 = arith.constant dense<0.000000e+00> : vector<16xf32>
    %246 = vector.multi_reduction <add>, %245, %cst_86 [1] : vector<16x32xf32> to vector<16xf32>
    %247 = vector.shape_cast %246 : vector<16xf32> to vector<16x1xf32>
    %cst_87 = arith.constant 3.200000e+01 : f32
    %248 = vector.broadcast %cst_87 : f32 to vector<16x1xf32>
    %249 = arith.divf %247, %248 : vector<16x1xf32>
    %250 = vector.broadcast %242 : vector<16x1xf32> to vector<16x32xf32>
    %251 = arith.subf %234, %250 : vector<16x32xf32>
    %cst_88 = arith.constant 9.99999997E-7 : f32
    %252 = vector.broadcast %cst_88 : f32 to vector<16x1xf32>
    %253 = arith.addf %249, %252 : vector<16x1xf32>
    %254 = math.rsqrt %253 : vector<16x1xf32>
    %255 = vector.broadcast %254 : vector<16x1xf32> to vector<16x32xf32>
    %256 = arith.mulf %251, %255 : vector<16x32xf32>
    %257 = vector.broadcast %236 : vector<1x32xf32> to vector<16x32xf32>
    %258 = arith.mulf %256, %257 : vector<16x32xf32>
    %259 = vector.broadcast %238 : vector<1x32xf32> to vector<16x32xf32>
    %260 = arith.addf %258, %259 : vector<16x32xf32>
    %261 = arith.truncf %260 : vector<16x32xf32> to vector<16x32xbf16>
    %c0_89 = arith.constant 0 : index
    %c0_90 = arith.constant 0 : index
    %c0_91 = arith.constant 0 : index
    %262 = vector.load %arg12[%c0_89, %c0_90, %c0_91] : memref<1x32x128xbf16, #tpu.memory_space<vmem>>, vector<1x32x128xbf16>
    %263 = vector.shape_cast %262 : vector<1x32x128xbf16> to vector<32x128xbf16>
    %cst_92 = arith.constant dense<0.000000e+00> : vector<16x128xf32>
    %264 = tpu.matmul %261, %263, %cst_92 {dimension_numbers = #tpu.dot_dimension_numbers<[1], [0], [0], [1], [0, 0, 1, 1], [], []>} : vector<16x32xbf16>, vector<32x128xbf16>, vector<16x128xf32> -> vector<16x128xf32>
    %c0_93 = arith.constant 0 : index
    %c0_94 = arith.constant 0 : index
    %c0_95 = arith.constant 0 : index
    %265 = vector.load %arg13[%c0_93, %c0_94, %c0_95] : memref<1x1x128xf32, #tpu.memory_space<vmem>>, vector<1x1x128xf32>
    %266 = vector.shape_cast %265 : vector<1x1x128xf32> to vector<1x128xf32>
    %267 = vector.broadcast %266 : vector<1x128xf32> to vector<16x128xf32>
    %268 = arith.addf %264, %267 : vector<16x128xf32>
    %cst_96 = arith.constant 5.000000e-01 : f32
    %269 = vector.broadcast %cst_96 : f32 to vector<16x128xf32>
    %270 = arith.mulf %269, %268 : vector<16x128xf32>
    %cst_97 = arith.constant 0.707106769 : f32
    %271 = vector.broadcast %cst_97 : f32 to vector<16x128xf32>
    %272 = arith.mulf %268, %271 : vector<16x128xf32>
    %cst_98 = arith.constant 0.000000e+00 : f32
    %273 = vector.broadcast %cst_98 : f32 to vector<16x128xf32>
    %274 = arith.cmpf oge, %272, %273 : vector<16x128xf32>
    %cst_99 = arith.constant 1.000000e+00 : f32
    %cst_100 = arith.constant -1.000000e+00 : f32
    %275 = vector.broadcast %cst_99 : f32 to vector<16x128xf32>
    %276 = vector.broadcast %cst_100 : f32 to vector<16x128xf32>
    %277 = arith.select %274, %275, %276 : vector<16x128xi1>, vector<16x128xf32>
    %278 = math.absf %272 : vector<16x128xf32>
    %cst_101 = arith.constant 0.327591091 : f32
    %279 = vector.broadcast %cst_101 : f32 to vector<16x128xf32>
    %280 = arith.mulf %279, %278 : vector<16x128xf32>
    %cst_102 = arith.constant 1.000000e+00 : f32
    %281 = vector.broadcast %cst_102 : f32 to vector<16x128xf32>
    %282 = arith.addf %281, %280 : vector<16x128xf32>
    %cst_103 = arith.constant 1.000000e+00 : f32
    %283 = vector.broadcast %cst_103 : f32 to vector<16x128xf32>
    %284 = arith.divf %283, %282 : vector<16x128xf32>
    %cst_104 = arith.constant 1.06140542 : f32
    %285 = vector.broadcast %cst_104 : f32 to vector<16x128xf32>
    %286 = arith.mulf %285, %284 : vector<16x128xf32>
    %cst_105 = arith.constant -1.45315206 : f32
    %287 = vector.broadcast %cst_105 : f32 to vector<16x128xf32>
    %288 = arith.addf %286, %287 : vector<16x128xf32>
    %289 = arith.mulf %288, %284 : vector<16x128xf32>
    %cst_106 = arith.constant 1.42141378 : f32
    %290 = vector.broadcast %cst_106 : f32 to vector<16x128xf32>
    %291 = arith.addf %289, %290 : vector<16x128xf32>
    %292 = arith.mulf %291, %284 : vector<16x128xf32>
    %cst_107 = arith.constant -0.284496725 : f32
    %293 = vector.broadcast %cst_107 : f32 to vector<16x128xf32>
    %294 = arith.addf %292, %293 : vector<16x128xf32>
    %295 = arith.mulf %294, %284 : vector<16x128xf32>
    %cst_108 = arith.constant 0.254829586 : f32
    %296 = vector.broadcast %cst_108 : f32 to vector<16x128xf32>
    %297 = arith.addf %295, %296 : vector<16x128xf32>
    %298 = arith.mulf %297, %284 : vector<16x128xf32>
    %cst_109 = arith.constant 0.000000e+00 : f32
    %299 = vector.broadcast %cst_109 : f32 to vector<16x128xf32>
    %300 = arith.subf %299, %278 : vector<16x128xf32>
    %301 = arith.mulf %300, %278 : vector<16x128xf32>
    %302 = math.exp %301 : vector<16x128xf32>
    %303 = arith.mulf %298, %302 : vector<16x128xf32>
    %cst_110 = arith.constant 1.000000e+00 : f32
    %304 = vector.broadcast %cst_110 : f32 to vector<16x128xf32>
    %305 = arith.subf %304, %303 : vector<16x128xf32>
    %306 = arith.mulf %277, %305 : vector<16x128xf32>
    %cst_111 = arith.constant 1.000000e+00 : f32
    %307 = vector.broadcast %cst_111 : f32 to vector<16x128xf32>
    %308 = arith.addf %307, %306 : vector<16x128xf32>
    %309 = arith.mulf %270, %308 : vector<16x128xf32>
    %310 = arith.truncf %309 : vector<16x128xf32> to vector<16x128xbf16>
    %c0_112 = arith.constant 0 : index
    %c0_113 = arith.constant 0 : index
    %c0_114 = arith.constant 0 : index
    %311 = vector.load %arg14[%c0_112, %c0_113, %c0_114] : memref<1x128x32xbf16, #tpu.memory_space<vmem>>, vector<1x128x32xbf16>
    %312 = vector.shape_cast %311 : vector<1x128x32xbf16> to vector<128x32xbf16>
    %cst_115 = arith.constant dense<0.000000e+00> : vector<16x32xf32>
    %313 = tpu.matmul %310, %312, %cst_115 {dimension_numbers = #tpu.dot_dimension_numbers<[1], [0], [0], [1], [0, 0, 1, 1], [], []>} : vector<16x128xbf16>, vector<128x32xbf16>, vector<16x32xf32> -> vector<16x32xf32>
    %c0_116 = arith.constant 0 : index
    %c0_117 = arith.constant 0 : index
    %c0_118 = arith.constant 0 : index
    %314 = vector.load %arg15[%c0_116, %c0_117, %c0_118] : memref<1x1x32xf32, #tpu.memory_space<vmem>>, vector<1x1x32xf32>
    %315 = vector.shape_cast %314 : vector<1x1x32xf32> to vector<1x32xf32>
    %316 = vector.broadcast %315 : vector<1x32xf32> to vector<16x32xf32>
    %317 = arith.addf %313, %316 : vector<16x32xf32>
    %318 = arith.addf %234, %317 : vector<16x32xf32>
    %c0_119 = arith.constant 0 : index
    %c0_120 = arith.constant 0 : index
    %319 = vector.load %arg19[%c0_119, %c0_120] : memref<16x32xf32, #tpu.memory_space<vmem>>, vector<16x32xf32>
    tpu.vector_store %arg19[%c0_119, %c0_120], %318 {strides = array<i32>} : memref<16x32xf32, #tpu.memory_space<vmem>>, vector<16x32xf32>,
    %c1_i32 = arith.constant 1 : i32
    %320 = arith.cmpi eq, %arg1, %c1_i32 : i32
    %321 = arith.extui %320 : i1 to i32
    %c0_i32_121 = arith.constant 0 : i32
    %322 = arith.cmpi ne, %321, %c0_i32_121 : i32
    scf.if %322 {
      %c0_122 = arith.constant 0 : index
      %c0_123 = arith.constant 0 : index
      %323 = vector.load %arg16[%c0_122, %c0_123] : memref<1x32xf32, #tpu.memory_space<vmem>>, vector<1x32xf32>
      %c0_124 = arith.constant 0 : index
      %c0_125 = arith.constant 0 : index
      %324 = vector.load %arg17[%c0_124, %c0_125] : memref<1x32xf32, #tpu.memory_space<vmem>>, vector<1x32xf32>
      %cst_126 = arith.constant dense<0.000000e+00> : vector<16xf32>
      %325 = vector.multi_reduction <add>, %318, %cst_126 [1] : vector<16x32xf32> to vector<16xf32>
      %326 = vector.shape_cast %325 : vector<16xf32> to vector<16x1xf32>
      %cst_127 = arith.constant 3.200000e+01 : f32
      %327 = vector.broadcast %cst_127 : f32 to vector<16x1xf32>
      %328 = arith.divf %326, %327 : vector<16x1xf32>
      %329 = vector.broadcast %328 : vector<16x1xf32> to vector<16x32xf32>
      %330 = arith.subf %318, %329 : vector<16x32xf32>
      %331 = arith.mulf %330, %330 : vector<16x32xf32>
      %cst_128 = arith.constant dense<0.000000e+00> : vector<16xf32>
      %332 = vector.multi_reduction <add>, %331, %cst_128 [1] : vector<16x32xf32> to vector<16xf32>
      %333 = vector.shape_cast %332 : vector<16xf32> to vector<16x1xf32>
      %cst_129 = arith.constant 3.200000e+01 : f32
      %334 = vector.broadcast %cst_129 : f32 to vector<16x1xf32>
      %335 = arith.divf %333, %334 : vector<16x1xf32>
      %336 = vector.broadcast %328 : vector<16x1xf32> to vector<16x32xf32>
      %337 = arith.subf %318, %336 : vector<16x32xf32>
      %cst_130 = arith.constant 9.99999997E-7 : f32
      %338 = vector.broadcast %cst_130 : f32 to vector<16x1xf32>
      %339 = arith.addf %335, %338 : vector<16x1xf32>
      %340 = math.rsqrt %339 : vector<16x1xf32>
      %341 = vector.broadcast %340 : vector<16x1xf32> to vector<16x32xf32>
      %342 = arith.mulf %337, %341 : vector<16x32xf32>
      %343 = vector.broadcast %323 : vector<1x32xf32> to vector<16x32xf32>
      %344 = arith.mulf %342, %343 : vector<16x32xf32>
      %345 = vector.broadcast %324 : vector<1x32xf32> to vector<16x32xf32>
      %346 = arith.addf %344, %345 : vector<16x32xf32>
      %347 = vector.shape_cast %346 : vector<16x32xf32> to vector<2x8x32xf32>
      %c0_131 = arith.constant 0 : index
      %c0_132 = arith.constant 0 : index
      %c0_133 = arith.constant 0 : index
      %348 = vector.load %arg18[%c0_131, %c0_132, %c0_133] : memref<2x8x32xf32, #tpu.memory_space<vmem>>, vector<2x8x32xf32>
      tpu.vector_store %arg18[%c0_131, %c0_132, %c0_133], %347 {strides = array<i32>} : memref<2x8x32xf32, #tpu.memory_space<vmem>>, vector<2x8x32xf32>,
    } else {
    }
    return
  }
  func.func @transform_0(%arg0: i32, %arg1: i32) -> (i32, i32, i32) {
    %c0_i32 = arith.constant 0 : i32
    %c0_i32_0 = arith.constant 0 : i32
    %c0_i32_1 = arith.constant 0 : i32
    return %arg0, %c0_i32, %c0_i32_0 : i32, i32, i32
  }
  func.func @transform_1(%arg0: i32, %arg1: i32) -> (i32, i32, i32) {
    %c0_i32 = arith.constant 0 : i32
    %c0_i32_0 = arith.constant 0 : i32
    %c0_i32_1 = arith.constant 0 : i32
    return %arg0, %c0_i32, %c0_i32_0 : i32, i32, i32
  }
  func.func @transform_2(%arg0: i32, %arg1: i32) -> (i32, i32, i32) {
    %c0_i32 = arith.constant 0 : i32
    %c0_i32_0 = arith.constant 0 : i32
    %c0_i32_1 = arith.constant 0 : i32
    return %arg1, %c0_i32, %c0_i32_0 : i32, i32, i32
  }
  func.func @transform_3(%arg0: i32, %arg1: i32) -> (i32, i32, i32) {
    %c0_i32 = arith.constant 0 : i32
    %c0_i32_0 = arith.constant 0 : i32
    %c0_i32_1 = arith.constant 0 : i32
    return %arg1, %c0_i32, %c0_i32_0 : i32, i32, i32
  }
  func.func @transform_4(%arg0: i32, %arg1: i32) -> (i32, i32, i32) {
    %c0_i32 = arith.constant 0 : i32
    %c0_i32_0 = arith.constant 0 : i32
    %c0_i32_1 = arith.constant 0 : i32
    return %arg1, %c0_i32, %c0_i32_0 : i32, i32, i32
  }
  func.func @transform_5(%arg0: i32, %arg1: i32) -> (i32, i32, i32) {
    %c0_i32 = arith.constant 0 : i32
    %c0_i32_0 = arith.constant 0 : i32
    %c0_i32_1 = arith.constant 0 : i32
    return %arg1, %c0_i32, %c0_i32_0 : i32, i32, i32
  }
  func.func @transform_6(%arg0: i32, %arg1: i32) -> (i32, i32, i32) {
    %c0_i32 = arith.constant 0 : i32
    %c0_i32_0 = arith.constant 0 : i32
    %c0_i32_1 = arith.constant 0 : i32
    return %arg1, %c0_i32, %c0_i32_0 : i32, i32, i32
  }
  func.func @transform_7(%arg0: i32, %arg1: i32) -> (i32, i32, i32) {
    %c0_i32 = arith.constant 0 : i32
    %c0_i32_0 = arith.constant 0 : i32
    %c0_i32_1 = arith.constant 0 : i32
    return %arg1, %c0_i32, %c0_i32_0 : i32, i32, i32
  }
  func.func @transform_8(%arg0: i32, %arg1: i32) -> (i32, i32, i32) {
    %c0_i32 = arith.constant 0 : i32
    %c0_i32_0 = arith.constant 0 : i32
    %c0_i32_1 = arith.constant 0 : i32
    return %arg1, %c0_i32, %c0_i32_0 : i32, i32, i32
  }
  func.func @transform_9(%arg0: i32, %arg1: i32) -> (i32, i32, i32) {
    %c0_i32 = arith.constant 0 : i32
    %c0_i32_0 = arith.constant 0 : i32
    %c0_i32_1 = arith.constant 0 : i32
    return %arg1, %c0_i32, %c0_i32_0 : i32, i32, i32
  }
  func.func @transform_10(%arg0: i32, %arg1: i32) -> (i32, i32, i32) {
    %c0_i32 = arith.constant 0 : i32
    %c0_i32_0 = arith.constant 0 : i32
    %c0_i32_1 = arith.constant 0 : i32
    return %arg1, %c0_i32, %c0_i32_0 : i32, i32, i32
  }
  func.func @transform_11(%arg0: i32, %arg1: i32) -> (i32, i32, i32) {
    %c0_i32 = arith.constant 0 : i32
    %c0_i32_0 = arith.constant 0 : i32
    %c0_i32_1 = arith.constant 0 : i32
    return %arg1, %c0_i32, %c0_i32_0 : i32, i32, i32
  }
  func.func @transform_12(%arg0: i32, %arg1: i32) -> (i32, i32, i32) {
    %c0_i32 = arith.constant 0 : i32
    %c0_i32_0 = arith.constant 0 : i32
    %c0_i32_1 = arith.constant 0 : i32
    return %arg1, %c0_i32, %c0_i32_0 : i32, i32, i32
  }
  func.func @transform_13(%arg0: i32, %arg1: i32) -> (i32, i32, i32) {
    %c0_i32 = arith.constant 0 : i32
    %c0_i32_0 = arith.constant 0 : i32
    %c0_i32_1 = arith.constant 0 : i32
    return %arg1, %c0_i32, %c0_i32_0 : i32, i32, i32
  }
  func.func @transform_14(%arg0: i32, %arg1: i32) -> (i32, i32) {
    %c0_i32 = arith.constant 0 : i32
    %c0_i32_0 = arith.constant 0 : i32
    %c0_i32_1 = arith.constant 0 : i32
    return %c0_i32, %c0_i32_0 : i32, i32
  }
  func.func @transform_15(%arg0: i32, %arg1: i32) -> (i32, i32) {
    %c0_i32 = arith.constant 0 : i32
    %c0_i32_0 = arith.constant 0 : i32
    %c0_i32_1 = arith.constant 0 : i32
    return %c0_i32, %c0_i32_0 : i32, i32
  }
  func.func @transform_16(%arg0: i32, %arg1: i32) -> (i32, i32, i32) {
    %c0_i32 = arith.constant 0 : i32
    %c0_i32_0 = arith.constant 0 : i32
    %c0_i32_1 = arith.constant 0 : i32
    return %arg0, %c0_i32, %c0_i32_0 : i32, i32, i32
  }
}

</mosaic_0001>

<llo_original>
// kernel: tpu_custom_call.1
$region0: #{tpu_custom_call.1}
  #allocation0 [shape = 'u32[]', space=smem, size = 0x4, offset = 0x4, fixed_abs, tag = 'smem constant byte address 0x4 - core index']
  #allocation1 [shape = 'u32[144,128]{1,0:T(1,128)}', space=vmem, size = 0x12000, scoped, tag = 'internal scratch']
  #allocation2 [shape = 'f32[16,32]{1,0:T(8,128)}', space=vmem, size = 0x2000, scoped, tag = 'scratch operand']
  #allocation3 [shape = 'bf16[16,32]{1,0:T(16,128)(2,1)}', space=vmem, size = 0x1000, scoped, tag = 'scratch operand']
  %s0 = inlined_call_operand.vmem [shape: f32[2,8,32], index: 0, kind: input, shape index: {}]
  %s1 = inlined_call_operand.vmem [shape: f32[2,1,8], index: 1, kind: input, shape index: {}]
  %s2 = inlined_call_operand.vmem [shape: f32[2,1,32], index: 2, kind: input, shape index: {}]
  %s3 = inlined_call_operand.vmem [shape: f32[2,1,32], index: 3, kind: input, shape index: {}]
  %s4 = inlined_call_operand.vmem [shape: bf16[2,32,96], index: 4, kind: input, shape index: {}]
  %s5 = inlined_call_operand.vmem [shape: f32[2,1,96], index: 5, kind: input, shape index: {}]
  %s6 = inlined_call_operand.vmem [shape: bf16[2,32,32], index: 6, kind: input, shape index: {}]
  %s7 = inlined_call_operand.vmem [shape: f32[2,1,32], index: 7, kind: input, shape index: {}]
  %s8 = inlined_call_operand.vmem [shape: f32[2,1,32], index: 8, kind: input, shape index: {}]
  %s9 = inlined_call_operand.vmem [shape: f32[2,1,32], index: 9, kind: input, shape index: {}]
  %s10 = inlined_call_operand.vmem [shape: bf16[2,32,128], index: 10, kind: input, shape index: {}]
  %s11 = inlined_call_operand.vmem [shape: f32[2,1,128], index: 11, kind: input, shape index: {}]
  %s12 = inlined_call_operand.vmem [shape: bf16[2,128,32], index: 12, kind: input, shape index: {}]
  %s13 = inlined_call_operand.vmem [shape: f32[2,1,32], index: 13, kind: input, shape index: {}]
  %s14 = inlined_call_operand.vmem [shape: f32[1,32], index: 14, kind: input, shape index: {}]
  %s15 = inlined_call_operand.vmem [shape: f32[1,32], index: 15, kind: input, shape index: {}]
  %s16 = inlined_call_operand.hbm [shape: f32[2,8,32], index: 16, kind: output, shape index: {}]
  %s17 = sld [smem:[#allocation0]]
  $region105: #{tpu_custom_call.1} parent=0
    _
  %s19 = ssub.s32 1, %s17
  %s20 = scalar_select 0, %s19, %s17
  $region1: #{tpu_custom_call.1} parent=0
    #allocation4 [shape = 'u8[8192]{0}', space=vmem, size = 0x2000, scoped, tag = 'output window, operand 0, single buffered']
    #allocation5 [shape = 's32[2]{0}', space=sflag, size = 0x8, scoped, tag = 'scoped memory for tpu_custom_call.1']
    %21 = vsyncpa [#allocation5], 0
    loop: start=0, step=1, limit=4
    $region2: #{tpu_custom_call.1} parent=1 // loop_pre_header
      _
    $region3: #{tpu_custom_call.1} parent=1 // loop_header
      %s23 = sphi 0, %s27
      %p24 = scmp.ge.s32.totalorder %s23, 4
      %s30 = sphi 0, %s42
      %s31 = sphi 0, %s38
      %s32 = sphi 0, %s30
      %s33 = sphi 0, %s31
      %s34 = sphi 0, %s32
      %s35 = sphi 0, %s33
      %s45 = sphi 0, %s47
      %s48 = sphi 0, %s45
      %s49 = sphi 0, %s48
      %s65 = sphi 0, %s49
      %s71 = sphi 0, %s73
      %s74 = sphi 0, %s71
      %s75 = sphi 0, %s74
      %s91 = sphi 0, %s75
      %s97 = sphi 0, %s99
      %s100 = sphi 0, %s97
      %s101 = sphi 0, %s100
      %s117 = sphi 0, %s101
      %s123 = sphi 0, %s125
      %s126 = sphi 0, %s123
      %s127 = sphi 0, %s126
      %s143 = sphi 0, %s127
      %s149 = sphi 0, %s151
      %s152 = sphi 0, %s149
      %s153 = sphi 0, %s152
      %s169 = sphi 0, %s153
      %s175 = sphi 0, %s177
      %s178 = sphi 0, %s175
      %s179 = sphi 0, %s178
      %s195 = sphi 0, %s179
      %s201 = sphi 0, %s203
      %s204 = sphi 0, %s201
      %s205 = sphi 0, %s204
      %s221 = sphi 0, %s205
      %s227 = sphi 0, %s229
      %s230 = sphi 0, %s227
      %s231 = sphi 0, %s230
      %s247 = sphi 0, %s231
      %s253 = sphi 0, %s255
      %s256 = sphi 0, %s253
      %s257 = sphi 0, %s256
      %s273 = sphi 0, %s257
      %s279 = sphi 0, %s281
      %s282 = sphi 0, %s279
      %s283 = sphi 0, %s282
      %s299 = sphi 0, %s283
      %s305 = sphi 0, %s307
      %s308 = sphi 0, %s305
      %s309 = sphi 0, %s308
      %s325 = sphi 0, %s309
      %s331 = sphi 0, %s333
      %s334 = sphi 0, %s331
      %s335 = sphi 0, %s334
      %s351 = sphi 0, %s335
      %s357 = sphi 0, %s359
      %s360 = sphi 0, %s357
      %s361 = sphi 0, %s360
      %s377 = sphi 0, %s361
      %s383 = sphi 0, %s385
      %s386 = sphi 0, %s383
      %s387 = sphi 0, %s386
      %s403 = sphi 0, %s387
      %s407 = sphi 0, %s407
      %s409 = sphi 0, %s407
      %s410 = sphi 0, %s409
      %s424 = sphi 0, %s410
      %s428 = sphi 0, %s428
      %s430 = sphi 0, %s428
      %s431 = sphi 0, %s430
      %s445 = sphi 0, %s431
      %s451 = sphi 0, %s453
      %s454 = sphi 0, %s451
      %s455 = sphi 0, %s454
      %s471 = sphi 0, %s455
    $region4: #{tpu_custom_call.1} parent=1 // loop_header_branch
      %26 = sbr.rel (%p24) target = $region8
    $region5: #{tpu_custom_call.1} parent=1 // loop_body
      %s28 = ssub.s32 %s23, 1
      %s29 = ssub.s32 %s23, 2
      %s36 = sadd.s32 1, %s31
      %p37 = scmp.ge.s32.totalorder %s36, 2
      %s38 = scalar_select %p37, 0, %s36
      %s39 = sadd.s32 1, %s30
      %s40 = scalar_select %p37, %s39, %s30
      %p41 = scmp.ge.s32.totalorder %s40, 1
      %s42 = scalar_select %p41, 0, %s40
      %s43 = ssub.s32 %s30, %s42
      %p44 = scmp.eq.s32.totalorder %s43, 0
      %s46 = sadd.s32 %s45, 1
      %s47 = scalar_select %p44, %s45, %s46
      %p50 = pneg %p44
      %p51 = scmp.eq.s32.totalorder %s23, 1
      %p52 = por %p50, %p51
      %p53 = scmp.ne.s32.totalorder %s45, %s48
      %p54 = scmp.eq.s32.totalorder %s23, 0
      %p55 = por %p53, %p54
      %p56 = scmp.ne.s32.totalorder %s45, %s48
      %p57 = scmp.eq.s32.totalorder %s28, 1
      %p58 = por %p56, %p57
      %p59 = scmp.ne.s32.totalorder %s48, %s49
      %p60 = scmp.eq.s32.totalorder %s28, 0
      %p61 = por %p59, %p60
      %p62 = scmp.ne.s32.totalorder %s48, %s49
      %p63 = scmp.eq.s32.totalorder %s29, 1
      %p64 = por %p62, %p63
      %p66 = scmp.ne.s32.totalorder %s49, %s65
      %p67 = scmp.eq.s32.totalorder %s29, 0
      %p68 = por %p66, %p67
      %s69 = ssub.s32 %s30, %s42
      %p70 = scmp.eq.s32.totalorder %s69, 0
      %s72 = sadd.s32 %s71, 1
      %s73 = scalar_select %p70, %s71, %s72
      %p76 = pneg %p70
      %p77 = scmp.eq.s32.totalorder %s23, 1
      %p78 = por %p76, %p77
      %p79 = scmp.ne.s32.totalorder %s71, %s74
      %p80 = scmp.eq.s32.totalorder %s23, 0
      %p81 = por %p79, %p80
      %p82 = scmp.ne.s32.totalorder %s71, %s74
      %p83 = scmp.eq.s32.totalorder %s28, 1
      %p84 = por %p82, %p83
      %p85 = scmp.ne.s32.totalorder %s74, %s75
      %p86 = scmp.eq.s32.totalorder %s28, 0
      %p87 = por %p85, %p86
      %p88 = scmp.ne.s32.totalorder %s74, %s75
      %p89 = scmp.eq.s32.totalorder %s29, 1
      %p90 = por %p88, %p89
      %p92 = scmp.ne.s32.totalorder %s75, %s91
      %p93 = scmp.eq.s32.totalorder %s29, 0
      %p94 = por %p92, %p93
      %s95 = ssub.s32 %s31, %s38
      %p96 = scmp.eq.s32.totalorder %s95, 0
      %s98 = sadd.s32 %s97, 1
      %s99 = scalar_select %p96, %s97, %s98
      %p102 = pneg %p96
      %p103 = scmp.eq.s32.totalorder %s23, 1
      %p104 = por %p102, %p103
      %p105 = scmp.ne.s32.totalorder %s97, %s100
      %p106 = scmp.eq.s32.totalorder %s23, 0
      %p107 = por %p105, %p106
      %p108 = scmp.ne.s32.totalorder %s97, %s100
      %p109 = scmp.eq.s32.totalorder %s28, 1
      %p110 = por %p108, %p109
      %p111 = scmp.ne.s32.totalorder %s100, %s101
      %p112 = scmp.eq.s32.totalorder %s28, 0
      %p113 = por %p111, %p112
      %p114 = scmp.ne.s32.totalorder %s100, %s101
      %p115 = scmp.eq.s32.totalorder %s29, 1
      %p116 = por %p114, %p115
      %p118 = scmp.ne.s32.totalorder %s101, %s117
      %p119 = scmp.eq.s32.totalorder %s29, 0
      %p120 = por %p118, %p119
      %s121 = ssub.s32 %s31, %s38
      %p122 = scmp.eq.s32.totalorder %s121, 0
      %s124 = sadd.s32 %s123, 1
      %s125 = scalar_select %p122, %s123, %s124
      %p128 = pneg %p122
      %p129 = scmp.eq.s32.totalorder %s23, 1
      %p130 = por %p128, %p129
      %p131 = scmp.ne.s32.totalorder %s123, %s126
      %p132 = scmp.eq.s32.totalorder %s23, 0
      %p133 = por %p131, %p132
      %p134 = scmp.ne.s32.totalorder %s123, %s126
      %p135 = scmp.eq.s32.totalorder %s28, 1
      %p136 = por %p134, %p135
      %p137 = scmp.ne.s32.totalorder %s126, %s127
      %p138 = scmp.eq.s32.totalorder %s28, 0
      %p139 = por %p137, %p138
      %p140 = scmp.ne.s32.totalorder %s126, %s127
      %p141 = scmp.eq.s32.totalorder %s29, 1
      %p142 = por %p140, %p141
      %p144 = scmp.ne.s32.totalorder %s127, %s143
      %p145 = scmp.eq.s32.totalorder %s29, 0
      %p146 = por %p144, %p145
      %s147 = ssub.s32 %s31, %s38
      %p148 = scmp.eq.s32.totalorder %s147, 0
      %s150 = sadd.s32 %s149, 1
      %s151 = scalar_select %p148, %s149, %s150
      %p154 = pneg %p148
      %p155 = scmp.eq.s32.totalorder %s23, 1
      %p156 = por %p154, %p155
      %p157 = scmp.ne.s32.totalorder %s149, %s152
      %p158 = scmp.eq.s32.totalorder %s23, 0
      %p159 = por %p157, %p158
      %p160 = scmp.ne.s32.totalorder %s149, %s152
      %p161 = scmp.eq.s32.totalorder %s28, 1
      %p162 = por %p160, %p161
      %p163 = scmp.ne.s32.totalorder %s152, %s153
      %p164 = scmp.eq.s32.totalorder %s28, 0
      %p165 = por %p163, %p164
      %p166 = scmp.ne.s32.totalorder %s152, %s153
      %p167 = scmp.eq.s32.totalorder %s29, 1
      %p168 = por %p166, %p167
      %p170 = scmp.ne.s32.totalorder %s153, %s169
      %p171 = scmp.eq.s32.totalorder %s29, 0
      %p172 = por %p170, %p171
      %s173 = ssub.s32 %s31, %s38
      %p174 = scmp.eq.s32.totalorder %s173, 0
      %s176 = sadd.s32 %s175, 1
      %s177 = scalar_select %p174, %s175, %s176
      %p180 = pneg %p174
      %p181 = scmp.eq.s32.totalorder %s23, 1
      %p182 = por %p180, %p181
      %p183 = scmp.ne.s32.totalorder %s175, %s178
      %p184 = scmp.eq.s32.totalorder %s23, 0
      %p185 = por %p183, %p184
      %p186 = scmp.ne.s32.totalorder %s175, %s178
      %p187 = scmp.eq.s32.totalorder %s28, 1
      %p188 = por %p186, %p187
      %p189 = scmp.ne.s32.totalorder %s178, %s179
      %p190 = scmp.eq.s32.totalorder %s28, 0
      %p191 = por %p189, %p190
      %p192 = scmp.ne.s32.totalorder %s178, %s179
      %p193 = scmp.eq.s32.totalorder %s29, 1
      %p194 = por %p192, %p193
      %p196 = scmp.ne.s32.totalorder %s179, %s195
      %p197 = scmp.eq.s32.totalorder %s29, 0
      %p198 = por %p196, %p197
      %s199 = ssub.s32 %s31, %s38
      %p200 = scmp.eq.s32.totalorder %s199, 0
      %s202 = sadd.s32 %s201, 1
      %s203 = scalar_select %p200, %s201, %s202
      %p206 = pneg %p200
      %p207 = scmp.eq.s32.totalorder %s23, 1
      %p208 = por %p206, %p207
      %p209 = scmp.ne.s32.totalorder %s201, %s204
      %p210 = scmp.eq.s32.totalorder %s23, 0
      %p211 = por %p209, %p210
      %p212 = scmp.ne.s32.totalorder %s201, %s204
      %p213 = scmp.eq.s32.totalorder %s28, 1
      %p214 = por %p212, %p213
      %p215 = scmp.ne.s32.totalorder %s204, %s205
      %p216 = scmp.eq.s32.totalorder %s28, 0
      %p217 = por %p215, %p216
      %p218 = scmp.ne.s32.totalorder %s204, %s205
      %p219 = scmp.eq.s32.totalorder %s29, 1
      %p220 = por %p218, %p219
      %p222 = scmp.ne.s32.totalorder %s205, %s221
      %p223 = scmp.eq.s32.totalorder %s29, 0
      %p224 = por %p222, %p223
      %s225 = ssub.s32 %s31, %s38
      %p226 = scmp.eq.s32.totalorder %s225, 0
      %s228 = sadd.s32 %s227, 1
      %s229 = scalar_select %p226, %s227, %s228
      %p232 = pneg %p226
      %p233 = scmp.eq.s32.totalorder %s23, 1
      %p234 = por %p232, %p233
      %p235 = scmp.ne.s32.totalorder %s227, %s230
      %p236 = scmp.eq.s32.totalorder %s23, 0
      %p237 = por %p235, %p236
      %p238 = scmp.ne.s32.totalorder %s227, %s230
      %p239 = scmp.eq.s32.totalorder %s28, 1
      %p240 = por %p238, %p239
      %p241 = scmp.ne.s32.totalorder %s230, %s231
      %p242 = scmp.eq.s32.totalorder %s28, 0
      %p243 = por %p241, %p242
      %p244 = scmp.ne.s32.totalorder %s230, %s231
      %p245 = scmp.eq.s32.totalorder %s29, 1
      %p246 = por %p244, %p245
      %p248 = scmp.ne.s32.totalorder %s231, %s247
      %p249 = scmp.eq.s32.totalorder %s29, 0
      %p250 = por %p248, %p249
      %s251 = ssub.s32 %s31, %s38
      %p252 = scmp.eq.s32.totalorder %s251, 0
      %s254 = sadd.s32 %s253, 1
      %s255 = scalar_select %p252, %s253, %s254
      %p258 = pneg %p252
      %p259 = scmp.eq.s32.totalorder %s23, 1
      %p260 = por %p258, %p259
      %p261 = scmp.ne.s32.totalorder %s253, %s256
      %p262 = scmp.eq.s32.totalorder %s23, 0
      %p263 = por %p261, %p262
      %p264 = scmp.ne.s32.totalorder %s253, %s256
      %p265 = scmp.eq.s32.totalorder %s28, 1
      %p266 = por %p264, %p265
      %p267 = scmp.ne.s32.totalorder %s256, %s257
      %p268 = scmp.eq.s32.totalorder %s28, 0
      %p269 = por %p267, %p268
      %p270 = scmp.ne.s32.totalorder %s256, %s257
      %p271 = scmp.eq.s32.totalorder %s29, 1
      %p272 = por %p270, %p271
      %p274 = scmp.ne.s32.totalorder %s257, %s273
      %p275 = scmp.eq.s32.totalorder %s29, 0
      %p276 = por %p274, %p275
      %s277 = ssub.s32 %s31, %s38
      %p278 = scmp.eq.s32.totalorder %s277, 0
      %s280 = sadd.s32 %s279, 1
      %s281 = scalar_select %p278, %s279, %s280
      %p284 = pneg %p278
      %p285 = scmp.eq.s32.totalorder %s23, 1
      %p286 = por %p284, %p285
      %p287 = scmp.ne.s32.totalorder %s279, %s282
      %p288 = scmp.eq.s32.totalorder %s23, 0
      %p289 = por %p287, %p288
      %p290 = scmp.ne.s32.totalorder %s279, %s282
      %p291 = scmp.eq.s32.totalorder %s28, 1
      %p292 = por %p290, %p291
      %p293 = scmp.ne.s32.totalorder %s282, %s283
      %p294 = scmp.eq.s32.totalorder %s28, 0
      %p295 = por %p293, %p294
      %p296 = scmp.ne.s32.totalorder %s282, %s283
      %p297 = scmp.eq.s32.totalorder %s29, 1
      %p298 = por %p296, %p297
      %p300 = scmp.ne.s32.totalorder %s283, %s299
      %p301 = scmp.eq.s32.totalorder %s29, 0
      %p302 = por %p300, %p301
      %s303 = ssub.s32 %s31, %s38
      %p304 = scmp.eq.s32.totalorder %s303, 0
      %s306 = sadd.s32 %s305, 1
      %s307 = scalar_select %p304, %s305, %s306
      %p310 = pneg %p304
      %p311 = scmp.eq.s32.totalorder %s23, 1
      %p312 = por %p310, %p311
      %p313 = scmp.ne.s32.totalorder %s305, %s308
      %p314 = scmp.eq.s32.totalorder %s23, 0
      %p315 = por %p313, %p314
      %p316 = scmp.ne.s32.totalorder %s305, %s308
      %p317 = scmp.eq.s32.totalorder %s28, 1
      %p318 = por %p316, %p317
      %p319 = scmp.ne.s32.totalorder %s308, %s309
      %p320 = scmp.eq.s32.totalorder %s28, 0
      %p321 = por %p319, %p320
      %p322 = scmp.ne.s32.totalorder %s308, %s309
      %p323 = scmp.eq.s32.totalorder %s29, 1
      %p324 = por %p322, %p323
      %p326 = scmp.ne.s32.totalorder %s309, %s325
      %p327 = scmp.eq.s32.totalorder %s29, 0
      %p328 = por %p326, %p327
      %s329 = ssub.s32 %s31, %s38
      %p330 = scmp.eq.s32.totalorder %s329, 0
      %s332 = sadd.s32 %s331, 1
      %s333 = scalar_select %p330, %s331, %s332
      %p336 = pneg %p330
      %p337 = scmp.eq.s32.totalorder %s23, 1
      %p338 = por %p336, %p337
      %p339 = scmp.ne.s32.totalorder %s331, %s334
      %p340 = scmp.eq.s32.totalorder %s23, 0
      %p341 = por %p339, %p340
      %p342 = scmp.ne.s32.totalorder %s331, %s334
      %p343 = scmp.eq.s32.totalorder %s28, 1
      %p344 = por %p342, %p343
      %p345 = scmp.ne.s32.totalorder %s334, %s335
      %p346 = scmp.eq.s32.totalorder %s28, 0
      %p347 = por %p345, %p346
      %p348 = scmp.ne.s32.totalorder %s334, %s335
      %p349 = scmp.eq.s32.totalorder %s29, 1
      %p350 = por %p348, %p349
      %p352 = scmp.ne.s32.totalorder %s335, %s351
      %p353 = scmp.eq.s32.totalorder %s29, 0
      %p354 = por %p352, %p353
      %s355 = ssub.s32 %s31, %s38
      %p356 = scmp.eq.s32.totalorder %s355, 0
      %s358 = sadd.s32 %s357, 1
      %s359 = scalar_select %p356, %s357, %s358
      %p362 = pneg %p356
      %p363 = scmp.eq.s32.totalorder %s23, 1
      %p364 = por %p362, %p363
      %p365 = scmp.ne.s32.totalorder %s357, %s360
      %p366 = scmp.eq.s32.totalorder %s23, 0
      %p367 = por %p365, %p366
      %p368 = scmp.ne.s32.totalorder %s357, %s360
      %p369 = scmp.eq.s32.totalorder %s28, 1
      %p370 = por %p368, %p369
      %p371 = scmp.ne.s32.totalorder %s360, %s361
      %p372 = scmp.eq.s32.totalorder %s28, 0
      %p373 = por %p371, %p372
      %p374 = scmp.ne.s32.totalorder %s360, %s361
      %p375 = scmp.eq.s32.totalorder %s29, 1
      %p376 = por %p374, %p375
      %p378 = scmp.ne.s32.totalorder %s361, %s377
      %p379 = scmp.eq.s32.totalorder %s29, 0
      %p380 = por %p378, %p379
      %s381 = ssub.s32 %s31, %s38
      %p382 = scmp.eq.s32.totalorder %s381, 0
      %s384 = sadd.s32 %s383, 1
      %s385 = scalar_select %p382, %s383, %s384
      %p388 = pneg %p382
      %p389 = scmp.eq.s32.totalorder %s23, 1
      %p390 = por %p388, %p389
      %p391 = scmp.ne.s32.totalorder %s383, %s386
      %p392 = scmp.eq.s32.totalorder %s23, 0
      %p393 = por %p391, %p392
      %p394 = scmp.ne.s32.totalorder %s383, %s386
      %p395 = scmp.eq.s32.totalorder %s28, 1
      %p396 = por %p394, %p395
      %p397 = scmp.ne.s32.totalorder %s386, %s387
      %p398 = scmp.eq.s32.totalorder %s28, 0
      %p399 = por %p397, %p398
      %p400 = scmp.ne.s32.totalorder %s386, %s387
      %p401 = scmp.eq.s32.totalorder %s29, 1
      %p402 = por %p400, %p401
      %p404 = scmp.ne.s32.totalorder %s387, %s403
      %p405 = scmp.eq.s32.totalorder %s29, 0
      %p406 = por %p404, %p405
      %s408 = sadd.s32 %s407, 1
      %p411 = scmp.eq.s32.totalorder %s23, 1
      %p412 = scmp.ne.s32.totalorder %s407, %s409
      %p413 = scmp.eq.s32.totalorder %s23, 0
      %p414 = por %p412, %p413
      %p415 = scmp.ne.s32.totalorder %s407, %s409
      %p416 = scmp.eq.s32.totalorder %s28, 1
      %p417 = por %p415, %p416
      %p418 = scmp.ne.s32.totalorder %s409, %s410
      %p419 = scmp.eq.s32.totalorder %s28, 0
      %p420 = por %p418, %p419
      %p421 = scmp.ne.s32.totalorder %s409, %s410
      %p422 = scmp.eq.s32.totalorder %s29, 1
      %p423 = por %p421, %p422
      %p425 = scmp.ne.s32.totalorder %s410, %s424
      %p426 = scmp.eq.s32.totalorder %s29, 0
      %p427 = por %p425, %p426
      %s429 = sadd.s32 %s428, 1
      %p432 = scmp.eq.s32.totalorder %s23, 1
      %p433 = scmp.ne.s32.totalorder %s428, %s430
      %p434 = scmp.eq.s32.totalorder %s23, 0
      %p435 = por %p433, %p434
      %p436 = scmp.ne.s32.totalorder %s428, %s430
      %p437 = scmp.eq.s32.totalorder %s28, 1
      %p438 = por %p436, %p437
      %p439 = scmp.ne.s32.totalorder %s430, %s431
      %p440 = scmp.eq.s32.totalorder %s28, 0
      %p441 = por %p439, %p440
      %p442 = scmp.ne.s32.totalorder %s430, %s431
      %p443 = scmp.eq.s32.totalorder %s29, 1
      %p444 = por %p442, %p443
      %p446 = scmp.ne.s32.totalorder %s431, %s445
      %p447 = scmp.eq.s32.totalorder %s29, 0
      %p448 = por %p446, %p447
      %s449 = ssub.s32 %s30, %s42
      %p450 = scmp.eq.s32.totalorder %s449, 0
      %s452 = sadd.s32 %s451, 1
      %s453 = scalar_select %p450, %s451, %s452
      %p456 = pneg %p450
      %p457 = scmp.eq.s32.totalorder %s23, 1
      %p458 = por %p456, %p457
      %p459 = scmp.ne.s32.totalorder %s451, %s454
      %p460 = scmp.eq.s32.totalorder %s23, 0
      %p461 = por %p459, %p460
      %p462 = scmp.ne.s32.totalorder %s451, %s454
      %p463 = scmp.eq.s32.totalorder %s28, 1
      %p464 = por %p462, %p463
      %p465 = scmp.ne.s32.totalorder %s454, %s455
      %p466 = scmp.eq.s32.totalorder %s28, 0
      %p467 = por %p465, %p466
      %p468 = scmp.ne.s32.totalorder %s454, %s455
      %p469 = scmp.eq.s32.totalorder %s29, 1
      %p470 = por %p468, %p469
      %p472 = scmp.ne.s32.totalorder %s455, %s471
      %p473 = scmp.eq.s32.totalorder %s29, 0
      %p474 = por %p472, %p473
      %p475 = scmp.le.s32.totalorder 1, %s23
      %p476 = scmp.lt.s32.totalorder %s23, 3
      %p477 = pnand %p475, %p476
      %p478 = pneg %p477
      // Predicated region
      $region9: #{tpu_custom_call.1} parent=5 // pred_check
        _
      $region10: #{tpu_custom_call.1} parent=5 // pred_check_branch
        %480 = sbr.rel (%p477) target = $region12
      $region11: #{tpu_custom_call.1} parent=5 // pred_region
        %s481 = ssub.s32 %s23, 1
        // Predicated region
        $region13: #{tpu_custom_call.1} parent=11 // pred_check
          %p482 = pneg %p61
        $region14: #{tpu_custom_call.1} parent=11 // pred_check_branch
          %484 = sbr.rel (%p482) target = $region16
        $region15: #{tpu_custom_call.1} parent=11 // pred_region
          %s485 = smul.u32 2, %s32
          %p486 = scmp.lt.s32.totalorder %s485, 1
          %s487 = scalar_select %p486, %s485, 1
          %s488 = smul.addr %s487, 8
          %s489 = scalar_lea.vmem %s0, %s488
          %s490 = smul.u32 2, %s32
        $region16: #{tpu_custom_call.1} parent=11 // pred_fallthru
          _
        // Predicated region
        $region17: #{tpu_custom_call.1} parent=11 // pred_check
          %p491 = pneg %p87
        $region18: #{tpu_custom_call.1} parent=11 // pred_check_branch
          %493 = sbr.rel (%p491) target = $region20
        $region19: #{tpu_custom_call.1} parent=11 // pred_region
          %s494 = smul.u32 2, %s32
          %p495 = scmp.lt.s32.totalorder %s494, 1
          %s496 = scalar_select %p495, %s494, 1
          %s497 = scalar_lea.vmem %s1, %s496
          %s498 = smul.u32 2, %s32
        $region20: #{tpu_custom_call.1} parent=11 // pred_fallthru
          _
        // Predicated region
        $region21: #{tpu_custom_call.1} parent=11 // pred_check
          %p499 = pneg %p420
        $region22: #{tpu_custom_call.1} parent=11 // pred_check_branch
          %501 = sbr.rel (%p499) target = $region24
        $region23: #{tpu_custom_call.1} parent=11 // pred_region
          _
        $region24: #{tpu_custom_call.1} parent=11 // pred_fallthru
          _
        // Predicated region
        $region25: #{tpu_custom_call.1} parent=11 // pred_check
          %p502 = pneg %p441
        $region26: #{tpu_custom_call.1} parent=11 // pred_check_branch
          %504 = sbr.rel (%p502) target = $region28
        $region27: #{tpu_custom_call.1} parent=11 // pred_region
          _
        $region28: #{tpu_custom_call.1} parent=11 // pred_fallthru
          _
      $region12: #{tpu_custom_call.1} parent=5 // pred_fallthru
        _
      %p505 = scmp.lt.s32.totalorder %s23, 2
      // Predicated region
      $region29: #{tpu_custom_call.1} parent=5 // pred_check
        %p506 = pneg %p505
      $region30: #{tpu_custom_call.1} parent=5 // pred_check_branch
        %508 = sbr.rel (%p506) target = $region32
      $region31: #{tpu_custom_call.1} parent=5 // pred_region
        // Predicated region
        $region33: #{tpu_custom_call.1} parent=31 // pred_check
          %p509 = pneg %p107
        $region34: #{tpu_custom_call.1} parent=31 // pred_check_branch
          %511 = sbr.rel (%p509) target = $region36
        $region35: #{tpu_custom_call.1} parent=31 // pred_region
          %p512 = scmp.lt.s32.totalorder %s31, 1
          %s513 = scalar_select %p512, %s31, 1
          %s514 = scalar_lea.vmem %s2, %s513
        $region36: #{tpu_custom_call.1} parent=31 // pred_fallthru
          _
        // Predicated region
        $region37: #{tpu_custom_call.1} parent=31 // pred_check
          %p515 = pneg %p133
        $region38: #{tpu_custom_call.1} parent=31 // pred_check_branch
          %517 = sbr.rel (%p515) target = $region40
        $region39: #{tpu_custom_call.1} parent=31 // pred_region
          %p518 = scmp.lt.s32.totalorder %s31, 1
          %s519 = scalar_select %p518, %s31, 1
          %s520 = scalar_lea.vmem %s3, %s519
        $region40: #{tpu_custom_call.1} parent=31 // pred_fallthru
          _
        // Predicated region
        $region41: #{tpu_custom_call.1} parent=31 // pred_check
          %p521 = pneg %p159
        $region42: #{tpu_custom_call.1} parent=31 // pred_check_branch
          %523 = sbr.rel (%p521) target = $region44
        $region43: #{tpu_custom_call.1} parent=31 // pred_region
          %p524 = scmp.lt.s32.totalorder %s31, 1
          %s525 = scalar_select %p524, %s31, 1
          %s526 = smul.addr %s525, 4
          %s527 = smul.addr %s526, 4
          %s528 = scalar_lea.vmem %s4, %s527
        $region44: #{tpu_custom_call.1} parent=31 // pred_fallthru
          _
        // Predicated region
        $region45: #{tpu_custom_call.1} parent=31 // pred_check
          %p529 = pneg %p185
        $region46: #{tpu_custom_call.1} parent=31 // pred_check_branch
          %531 = sbr.rel (%p529) target = $region48
        $region47: #{tpu_custom_call.1} parent=31 // pred_region
          %p532 = scmp.lt.s32.totalorder %s31, 1
          %s533 = scalar_select %p532, %s31, 1
          %s534 = scalar_lea.vmem %s5, %s533
        $region48: #{tpu_custom_call.1} parent=31 // pred_fallthru
          _
        // Predicated region
        $region49: #{tpu_custom_call.1} parent=31 // pred_check
          %p535 = pneg %p211
        $region50: #{tpu_custom_call.1} parent=31 // pred_check_branch
          %537 = sbr.rel (%p535) target = $region52
        $region51: #{tpu_custom_call.1} parent=31 // pred_region
          %p538 = scmp.lt.s32.totalorder %s31, 1
          %s539 = scalar_select %p538, %s31, 1
          %s540 = smul.addr %s539, 4
          %s541 = smul.addr %s540, 4
          %s542 = scalar_lea.vmem %s6, %s541
        $region52: #{tpu_custom_call.1} parent=31 // pred_fallthru
          _
        // Predicated region
        $region53: #{tpu_custom_call.1} parent=31 // pred_check
          %p543 = pneg %p237
        $region54: #{tpu_custom_call.1} parent=31 // pred_check_branch
          %545 = sbr.rel (%p543) target = $region56
        $region55: #{tpu_custom_call.1} parent=31 // pred_region
          %p546 = scmp.lt.s32.totalorder %s31, 1
          %s547 = scalar_select %p546, %s31, 1
          %s548 = scalar_lea.vmem %s7, %s547
        $region56: #{tpu_custom_call.1} parent=31 // pred_fallthru
          _
        // Predicated region
        $region57: #{tpu_custom_call.1} parent=31 // pred_check
          %p549 = pneg %p263
        $region58: #{tpu_custom_call.1} parent=31 // pred_check_branch
          %551 = sbr.rel (%p549) target = $region60
        $region59: #{tpu_custom_call.1} parent=31 // pred_region
          %p552 = scmp.lt.s32.totalorder %s31, 1
          %s553 = scalar_select %p552, %s31, 1
          %s554 = scalar_lea.vmem %s8, %s553
        $region60: #{tpu_custom_call.1} parent=31 // pred_fallthru
          _
        // Predicated region
        $region61: #{tpu_custom_call.1} parent=31 // pred_check
          %p555 = pneg %p289
        $region62: #{tpu_custom_call.1} parent=31 // pred_check_branch
          %557 = sbr.rel (%p555) target = $region64
        $region63: #{tpu_custom_call.1} parent=31 // pred_region
          %p558 = scmp.lt.s32.totalorder %s31, 1
          %s559 = scalar_select %p558, %s31, 1
          %s560 = scalar_lea.vmem %s9, %s559
        $region64: #{tpu_custom_call.1} parent=31 // pred_fallthru
          _
        // Predicated region
        $region65: #{tpu_custom_call.1} parent=31 // pred_check
          %p561 = pneg %p315
        $region66: #{tpu_custom_call.1} parent=31 // pred_check_branch
          %563 = sbr.rel (%p561) target = $region68
        $region67: #{tpu_custom_call.1} parent=31 // pred_region
          %p564 = scmp.lt.s32.totalorder %s31, 1
          %s565 = scalar_select %p564, %s31, 1
          %s566 = smul.addr %s565, 4
          %s567 = smul.addr %s566, 4
          %s568 = scalar_lea.vmem %s10, %s567
        $region68: #{tpu_custom_call.1} parent=31 // pred_fallthru
          _
        // Predicated region
        $region69: #{tpu_custom_call.1} parent=31 // pred_check
          %p569 = pneg %p341
        $region70: #{tpu_custom_call.1} parent=31 // pred_check_branch
          %571 = sbr.rel (%p569) target = $region72
        $region71: #{tpu_custom_call.1} parent=31 // pred_region
          %p572 = scmp.lt.s32.totalorder %s31, 1
          %s573 = scalar_select %p572, %s31, 1
          %s574 = scalar_lea.vmem %s11, %s573
        $region72: #{tpu_custom_call.1} parent=31 // pred_fallthru
          _
        // Predicated region
        $region73: #{tpu_custom_call.1} parent=31 // pred_check
          %p575 = pneg %p367
        $region74: #{tpu_custom_call.1} parent=31 // pred_check_branch
          %577 = sbr.rel (%p575) target = $region76
        $region75: #{tpu_custom_call.1} parent=31 // pred_region
          %p578 = scmp.lt.s32.totalorder %s31, 1
          %s579 = scalar_select %p578, %s31, 1
          %s580 = smul.addr %s579, 16
          %s581 = smul.addr %s580, 4
          %s582 = scalar_lea.vmem %s12, %s581
        $region76: #{tpu_custom_call.1} parent=31 // pred_fallthru
          _
        // Predicated region
        $region77: #{tpu_custom_call.1} parent=31 // pred_check
          %p583 = pneg %p393
        $region78: #{tpu_custom_call.1} parent=31 // pred_check_branch
          %585 = sbr.rel (%p583) target = $region80
        $region79: #{tpu_custom_call.1} parent=31 // pred_region
          %p586 = scmp.lt.s32.totalorder %s31, 1
          %s587 = scalar_select %p586, %s31, 1
          %s588 = scalar_lea.vmem %s13, %s587
        $region80: #{tpu_custom_call.1} parent=31 // pred_fallthru
          _
      $region32: #{tpu_custom_call.1} parent=5 // pred_fallthru
        _
      %p589 = scmp.le.s32.totalorder 1, %s23
      %p590 = scmp.lt.s32.totalorder %s23, 3
      %p591 = pnand %p589, %p590
      %p592 = pneg %p591
      // Predicated region
      $region81: #{tpu_custom_call.1} parent=5 // pred_check
        _
      $region82: #{tpu_custom_call.1} parent=5 // pred_check_branch
        %594 = sbr.rel (%p591) target = $region84
      $region83: #{tpu_custom_call.1} parent=5 // pred_region
        %s595 = ssub.s32 %s23, 1
        %s596 = smul.u32 2, %s32
        %p597 = scmp.lt.s32.totalorder %s596, 1
        %s598 = scalar_select %p597, %s596, 1
        %s599 = smul.addr %s598, 8
        %s600 = scalar_lea.vmem %s0, %s599
        %p601 = pneg %p61
        %p602 = pneg %p58
        %s603 = smul.u32 2, %s32
        %p604 = scmp.lt.s32.totalorder %s603, 1
        %s605 = scalar_select %p604, %s603, 1
        %s606 = scalar_lea.vmem %s1, %s605
        %p607 = pneg %p87
        %p608 = pneg %p84
        %p609 = scmp.lt.s32.totalorder %s33, 1
        %s610 = scalar_select %p609, %s33, 1
        %s611 = scalar_lea.vmem %s2, %s610
        %p612 = pneg %p113
        %p613 = pneg %p110
        %p614 = scmp.lt.s32.totalorder %s33, 1
        %s615 = scalar_select %p614, %s33, 1
        %s616 = scalar_lea.vmem %s3, %s615
        %p617 = pneg %p139
        %p618 = pneg %p136
        %p619 = scmp.lt.s32.totalorder %s33, 1
        %s620 = scalar_select %p619, %s33, 1
        %s621 = smul.addr %s620, 4
        %s622 = smul.addr %s621, 4
        %s623 = scalar_lea.vmem %s4, %s622
        %p624 = pneg %p165
        %p625 = pneg %p162
        %p626 = scmp.lt.s32.totalorder %s33, 1
        %s627 = scalar_select %p626, %s33, 1
        %s628 = scalar_lea.vmem %s5, %s627
        %p629 = pneg %p191
        %p630 = pneg %p188
        %p631 = scmp.lt.s32.totalorder %s33, 1
        %s632 = scalar_select %p631, %s33, 1
        %s633 = smul.addr %s632, 4
        %s634 = smul.addr %s633, 4
        %s635 = scalar_lea.vmem %s6, %s634
        %p636 = pneg %p217
        %p637 = pneg %p214
        %p638 = scmp.lt.s32.totalorder %s33, 1
        %s639 = scalar_select %p638, %s33, 1
        %s640 = scalar_lea.vmem %s7, %s639
        %p641 = pneg %p243
        %p642 = pneg %p240
        %p643 = scmp.lt.s32.totalorder %s33, 1
        %s644 = scalar_select %p643, %s33, 1
        %s645 = scalar_lea.vmem %s8, %s644
        %p646 = pneg %p269
        %p647 = pneg %p266
        %p648 = scmp.lt.s32.totalorder %s33, 1
        %s649 = scalar_select %p648, %s33, 1
        %s650 = scalar_lea.vmem %s9, %s649
        %p651 = pneg %p295
        %p652 = pneg %p292
        %p653 = scmp.lt.s32.totalorder %s33, 1
        %s654 = scalar_select %p653, %s33, 1
        %s655 = smul.addr %s654, 4
        %s656 = smul.addr %s655, 4
        %s657 = scalar_lea.vmem %s10, %s656
        %p658 = pneg %p321
        %p659 = pneg %p318
        %p660 = scmp.lt.s32.totalorder %s33, 1
        %s661 = scalar_select %p660, %s33, 1
        %s662 = scalar_lea.vmem %s11, %s661
        %p663 = pneg %p347
        %p664 = pneg %p344
        %p665 = scmp.lt.s32.totalorder %s33, 1
        %s666 = scalar_select %p665, %s33, 1
        %s667 = smul.addr %s666, 16
        %s668 = smul.addr %s667, 4
        %s669 = scalar_lea.vmem %s12, %s668
        %p670 = pneg %p373
        %p671 = pneg %p370
        %p672 = scmp.lt.s32.totalorder %s33, 1
        %s673 = scalar_select %p672, %s33, 1
        %s674 = scalar_lea.vmem %s13, %s673
        %p675 = pneg %p399
        %p676 = pneg %p396
        %p677 = pneg %p420
        %p678 = pneg %p417
        %p679 = pneg %p441
        %p680 = pneg %p438
        %p681 = pneg %p467
        %p682 = pneg %p464
        %s683 = smul.u32 2, %s32
        %p684 = scmp.lt.s32.totalorder %s683, 1
        %s685 = scalar_select %p684, %s683, 1
        %s686 = smul.addr %s685, 8
        %s687 = scalar_lea.vmem %s0, %s686
        %s688 = smul.u32 2, %s32
        %s689 = smul.u32 2, %s32
        %p690 = scmp.lt.s32.totalorder %s689, 1
        %s691 = scalar_select %p690, %s689, 1
        %s692 = scalar_lea.vmem %s1, %s691
        %s693 = smul.u32 2, %s32
        %p694 = scmp.lt.s32.totalorder %s33, 1
        %s695 = scalar_select %p694, %s33, 1
        %s696 = scalar_lea.vmem %s2, %s695
        %p697 = scmp.lt.s32.totalorder %s33, 1
        %s698 = scalar_select %p697, %s33, 1
        %s699 = scalar_lea.vmem %s3, %s698
        %p700 = scmp.lt.s32.totalorder %s33, 1
        %s701 = scalar_select %p700, %s33, 1
        %s702 = smul.addr %s701, 4
        %s703 = smul.addr %s702, 4
        %s704 = scalar_lea.vmem %s4, %s703
        %p705 = scmp.lt.s32.totalorder %s33, 1
        %s706 = scalar_select %p705, %s33, 1
        %s707 = scalar_lea.vmem %s5, %s706
        %p708 = scmp.lt.s32.totalorder %s33, 1
        %s709 = scalar_select %p708, %s33, 1
        %s710 = smul.addr %s709, 4
        %s711 = smul.addr %s710, 4
        %s712 = scalar_lea.vmem %s6, %s711
        %p713 = scmp.lt.s32.totalorder %s33, 1
        %s714 = scalar_select %p713, %s33, 1
        %s715 = scalar_lea.vmem %s7, %s714
        %p716 = scmp.lt.s32.totalorder %s33, 1
        %s717 = scalar_select %p716, %s33, 1
        %s718 = scalar_lea.vmem %s8, %s717
        %p719 = scmp.lt.s32.totalorder %s33, 1
        %s720 = scalar_select %p719, %s33, 1
        %s721 = scalar_lea.vmem %s9, %s720
        %p722 = scmp.lt.s32.totalorder %s33, 1
        %s723 = scalar_select %p722, %s33, 1
        %s724 = smul.addr %s723, 4
        %s725 = smul.addr %s724, 4
        %s726 = scalar_lea.vmem %s10, %s725
        %p727 = scmp.lt.s32.totalorder %s33, 1
        %s728 = scalar_select %p727, %s33, 1
        %s729 = scalar_lea.vmem %s11, %s728
        %p730 = scmp.lt.s32.totalorder %s33, 1
        %s731 = scalar_select %p730, %s33, 1
        %s732 = smul.addr %s731, 16
        %s733 = smul.addr %s732, 4
        %s734 = scalar_lea.vmem %s12, %s733
        %p735 = scmp.lt.s32.totalorder %s33, 1
        %s736 = scalar_select %p735, %s33, 1
        %s737 = scalar_lea.vmem %s13, %s736
        %s738 = smul.u32 2, %s32
        %p740 = scmp.eq.s32.totalorder %s33, 0
        // Predicated region
        $region85: #{tpu_custom_call.1} parent=83 // pred_check
          %p741 = pneg %p740
        $region86: #{tpu_custom_call.1} parent=83 // pred_check_branch
          %743 = sbr.rel (%p741) target = $region88
        $region87: #{tpu_custom_call.1} parent=83 // pred_region
          %v744 = vld [vmem:[%s687] sm:$0xff]
          %v745 = vld [vmem:[%s687 + $0x8] sm:$0xff]
          %vm746 = vcmask 261120
          %747 = vst.msk [vmem:[#allocation2] sm:$0xff] %vm746, %v744
          %748 = vst.msk [vmem:[#allocation2 + $0x8] sm:$0xff] %vm746, %v745
        $region88: #{tpu_custom_call.1} parent=83 // pred_fallthru
          _
        %v749 = vld [vmem:[#allocation2] sm:$0xff]
        %v750 = vld [vmem:[#allocation2 + $0x8] sm:$0xff]
        %v751 = vld [vmem:[%s696] sm:$0x1]
        %v752 = vld [vmem:[%s699] sm:$0x1]
        %vm753 = vcmask 261120
        %v754 = vsel %vm753, %v749, 0.0
        %755 = vadd.xlane.f32.xlu0 %v754
        %v756 = vpop.xlane.xlu0 %755
        %v757 = vsel %vm753, %v750, 0.0
        %758 = vadd.xlane.f32.xlu0 %v757
        %v759 = vpop.xlane.xlu0 %758
        %v760 = vrcp.pop 32.0
        %v761 = vmul.f32 %v756, %v760
        %v762 = vmul.f32 %v759, %v760
        %v763 = vsub.f32 %v749, %v761
        %v764 = vsub.f32 %v750, %v762
        %v765 = vmul.f32 %v763, %v763
        %v766 = vmul.f32 %v764, %v764
        %v767 = vsel %vm753, %v765, 0.0
        %768 = vadd.xlane.f32.xlu0 %v767
        %v769 = vpop.xlane.xlu0 %768
        %v770 = vsel %vm753, %v766, 0.0
        %771 = vadd.xlane.f32.xlu0 %v770
        %v772 = vpop.xlane.xlu0 %771
        %v773 = vmul.f32 %v769, %v760
        %v774 = vmul.f32 %v772, %v760
        %v775 = vadd.f32 %v773, 1e-06
        %v776 = vadd.f32 %v774, 1e-06
        %v777 = vrsqrt.pop %v775
        %v778 = vrsqrt.pop %v776
        %v779 = vmul.f32 %v763, %v777
        %v780 = vmul.f32 %v764, %v778
        %v782 = vlaneseq
        %v783 = vshrl.u32 %v782, 7
        %v784 = vsub.s32 0, %v783
        %v785 = vrot.slane %v751, %v784
        %v787 = vmul.f32 %v779, %v785
        %v788 = vmul.f32 %v780, %v785
        %v790 = vlaneseq
        %v791 = vshrl.u32 %v790, 7
        %v792 = vsub.s32 0, %v791
        %v793 = vrot.slane %v752, %v792
        %v795 = vadd.f32 %v787, %v793
        %v796 = vadd.f32 %v788, %v793
        %v797 = vpack.c.bf16 %v796, %v795
        %v798 = vld [vmem:[%s704] sm:$0xf]
        %v799 = vld [vmem:[%s704 + $0x4] sm:$0xf]
        %v800 = vld [vmem:[%s704 + $0x8] sm:$0xf]
        %v801 = vld [vmem:[%s704 + $0xc] sm:$0xf]
        %v802 = vld [vmem:[%s707] sm:$0x1]
        %v804 = vlaneseq
        %v805 = vshrl.u32 %v804, 7
        %v806 = vsub.s32 0, %v805
        %v807 = vrot.slane %v802, %v806
        %v813 = vunpack.c.l.b16 %v798
        %v814 = vunpack.c.l.b16 %v799
        %v815 = vunpack.c.l.b16 %v800
        %v816 = vunpack.c.l.b16 %v801
        %v817 = vpack.c.b16 %v814, %v813
        %v818 = vpack.c.b16 %v816, %v815
        %v822 = vsel %vm753, %v797, 0
        %824 = vmatprep.subr.bf16.mxu0 0
        %825 = vmatpush1.bf16.msra.mxu0 %v817
        %826 = vmatprep.subr.bf16.mxu0 0
        %827 = vmatpush1.bf16.msra.mxu0 %v818
        %828 = vmatprep.subr.bf16.mxu0 0
        %829 = vmatpush1.bf16.msra.mxu0 0
        %830 = vmatprep.subr.bf16.mxu0 0
        %831 = vmatpush1.bf16.msra.mxu0 0
        %832 = vmatprep.subr.bf16.mxu0 0
        %833 = vmatpush1.bf16.msra.mxu0 0
        %834 = vmatprep.subr.bf16.mxu0 0
        %835 = vmatpush1.bf16.msra.mxu0 0
        %836 = vmatprep.subr.bf16.mxu0 0
        %837 = vmatpush1.bf16.msra.mxu0 0
        %838 = vmatprep.subr.bf16.mxu0 0
        %839 = vmatpush1.bf16.msra.mxu0 0
        %840 = vmatprep.subr.bf16.mxu0 0
        %841 = vmatpush1.bf16.msra.mxu0 0
        %842 = vmatprep.subr.bf16.mxu0 0
        %843 = vmatpush1.bf16.msra.mxu0 0
        %844 = vmatprep.subr.bf16.mxu0 0
        %845 = vmatpush1.bf16.msra.mxu0 0
        %846 = vmatprep.subr.bf16.mxu0 0
        %847 = vmatpush1.bf16.msra.mxu0 0
        %848 = vmatprep.subr.bf16.mxu0 0
        %849 = vmatpush1.bf16.msra.mxu0 0
        %850 = vmatprep.subr.bf16.mxu0 0
        %851 = vmatpush1.bf16.msra.mxu0 0
        %852 = vmatprep.subr.bf16.mxu0 0
        %853 = vmatpush1.bf16.msra.mxu0 0
        %854 = vmatprep.subr.bf16.mxu0 0
        %855 = vmatpush1.bf16.msra.mxu0 0
        %856 = vmatprep.mubr.bf16.mxu0 0
        %857 = vmatmul.mubr.bf16.gmra.mrb[0].mxu0 %v822
        %v858 = vpop.f32.mrb[0].mxu0
        %v859 = vadd.f32 %v807, %v858
        %v860 = vpop.f32.mrb[0].mxu0
        %v861 = vpop.f32.mrb[0].mxu0
        %v862 = vadd.f32 %v807, %v861
        %v863 = vpop.f32.mrb[0].mxu0
        %864 = vdwg.mxu0
        %v865 = vld [vmem:[%s692] sm:$0x1]
        %v866 = vpack.c.bf16 %v859, %v859
        %v868 = vlaneseq
        %v869 = vshrl.u32 %v868, 7
        %v870 = vsub.s32 0, %v869
        %v871 = vrot.slane %v865, %v870
        %874 = vrot.lane.b32.xlu0 %v866, 96
        %v875 = vpop.permute.xlu0 %874
        %vm876 = vcmask 64512
        %v878 = vsel %vm876, %v866, 0
        %v881 = vsel %vm876, %v875, 0
        %883 = vmatprep.subr.bf16.mxu0 0
        %884 = vmatpush1.bf16.xpose.msra.mxu0 %v881
        %885 = vmatprep.subr.bf16.mxu0 0
        %886 = vmatpush1.bf16.xpose.msra.mxu0 0
        %887 = vmatprep.subr.bf16.mxu0 0
        %888 = vmatpush1.bf16.xpose.msra.mxu0 0
        %889 = vmatprep.subr.bf16.mxu0 0
        %890 = vmatpush1.bf16.xpose.msra.mxu0 0
        %891 = vmatprep.subr.bf16.mxu0 0
        %892 = vmatpush1.bf16.xpose.msra.mxu0 0
        %893 = vmatprep.subr.bf16.mxu0 0
        %894 = vmatpush1.bf16.xpose.msra.mxu0 0
        %895 = vmatprep.subr.bf16.mxu0 0
        %896 = vmatpush1.bf16.xpose.msra.mxu0 0
        %897 = vmatprep.subr.bf16.mxu0 0
        %898 = vmatpush1.bf16.xpose.msra.mxu0 0
        %899 = vmatprep.subr.bf16.mxu0 0
        %900 = vmatpush1.bf16.xpose.msra.mxu0 0
        %901 = vmatprep.subr.bf16.mxu0 0
        %902 = vmatpush1.bf16.xpose.msra.mxu0 0
        %903 = vmatprep.subr.bf16.mxu0 0
        %904 = vmatpush1.bf16.xpose.msra.mxu0 0
        %905 = vmatprep.subr.bf16.mxu0 0
        %906 = vmatpush1.bf16.xpose.msra.mxu0 0
        %907 = vmatprep.subr.bf16.mxu0 0
        %908 = vmatpush1.bf16.xpose.msra.mxu0 0
        %909 = vmatprep.subr.bf16.mxu0 0
        %910 = vmatpush1.bf16.xpose.msra.mxu0 0
        %911 = vmatprep.subr.bf16.mxu0 0
        %912 = vmatpush1.bf16.xpose.msra.mxu0 0
        %913 = vmatprep.subr.bf16.mxu0 0
        %914 = vmatpush1.bf16.xpose.msra.mxu0 0
        %915 = vmatprep.mubr.bf16.mxu0 0
        %916 = vmatmul.mubr.bf16.gmra.mrb[0].mxu0 %v878
        %v917 = vpop.f32.mrb[0].mxu0
        %v918 = vadd.f32 %v871, %v917
        %v919 = vpop.f32.mrb[0].mxu0
        %v920 = vpop.f32.mrb[0].mxu0
        %v921 = vpop.f32.mrb[0].mxu0
        %922 = vdwg.mxu0
        %v923 = vsel %vm876, %v918, -inf
        %924 = vmax.xlane.f32.xlu0 %v923
        %v925 = vpop.xlane.xlu0 %924
        %v926 = vsub.f32 %v918, %v925
        %v927 = vmul.f32 %v926, 1.442695
        %v928 = vpow.pop %v927
        %v929 = vsel %vm876, %v928, 0.0
        %930 = vadd.xlane.f32.xlu0 %v929
        %v931 = vpop.xlane.xlu0 %930
        %v932 = vrcp.pop %v931
        %v933 = vmul.f32 %v928, %v932
        %v934 = vpack.c.bf16 %v933, %v933
        %935 = vrot.lane.b32.xlu0 %v866, 64
        %v936 = vpop.permute.xlu0 %935
        %v938 = vsel %vm876, %v934, 0
        %vm940 = vcmask 1043456
        %v942 = vsel %vm940, %v936, 0
        %944 = vmatprep.subr.bf16.mxu0 0
        %945 = vmatpush1.bf16.msra.mxu0 %v942
        %946 = vmatprep.subr.bf16.mxu0 0
        %947 = vmatpush1.bf16.msra.mxu0 0
        %948 = vmatprep.subr.bf16.mxu0 0
        %949 = vmatpush1.bf16.msra.mxu0 0
        %950 = vmatprep.subr.bf16.mxu0 0
        %951 = vmatpush1.bf16.msra.mxu0 0
        %952 = vmatprep.subr.bf16.mxu0 0
        %953 = vmatpush1.bf16.msra.mxu0 0
        %954 = vmatprep.subr.bf16.mxu0 0
        %955 = vmatpush1.bf16.msra.mxu0 0
        %956 = vmatprep.subr.bf16.mxu0 0
        %957 = vmatpush1.bf16.msra.mxu0 0
        %958 = vmatprep.subr.bf16.mxu0 0
        %959 = vmatpush1.bf16.msra.mxu0 0
        %960 = vmatprep.subr.bf16.mxu0 0
        %961 = vmatpush1.bf16.msra.mxu0 0
        %962 = vmatprep.subr.bf16.mxu0 0
        %963 = vmatpush1.bf16.msra.mxu0 0
        %964 = vmatprep.subr.bf16.mxu0 0
        %965 = vmatpush1.bf16.msra.mxu0 0
        %966 = vmatprep.subr.bf16.mxu0 0
        %967 = vmatpush1.bf16.msra.mxu0 0
        %968 = vmatprep.subr.bf16.mxu0 0
        %969 = vmatpush1.bf16.msra.mxu0 0
        %970 = vmatprep.subr.bf16.mxu0 0
        %971 = vmatpush1.bf16.msra.mxu0 0
        %972 = vmatprep.subr.bf16.mxu0 0
        %973 = vmatpush1.bf16.msra.mxu0 0
        %974 = vmatprep.subr.bf16.mxu0 0
        %975 = vmatpush1.bf16.msra.mxu0 0
        %976 = vmatprep.mubr.bf16.mxu0 0
        %977 = vmatmul.mubr.bf16.gmra.mrb[0].mxu0 %v938
        %v978 = vpop.f32.mrb[0].mxu0
        %v979 = vadd.f32 0.0, %v978
        %v980 = vpop.f32.mrb[0].mxu0
        %v981 = vpop.f32.mrb[0].mxu0
        %v982 = vpop.f32.mrb[0].mxu0
        %983 = vdwg.mxu0
        %v984 = vpack.c.bf16 %v979, %v979
        %vm985 = vcmask 60416
        %986 = vst.msk [vmem:[#allocation3] sm:$0xf] %vm985, %v984
        %987 = vrot.lane.b32.xlu0 %v866, 120
        %v988 = vpop.permute.xlu0 %987
        %989 = vrot.lane.b32.xlu0 %v866, 88
        %v990 = vpop.permute.xlu0 %989
        %v992 = vsel %vm876, %v988, 0
        %v995 = vsel %vm876, %v990, 0
        %997 = vmatprep.subr.bf16.mxu0 0
        %998 = vmatpush1.bf16.xpose.msra.mxu0 %v995
        %999 = vmatprep.subr.bf16.mxu0 0
        %1000 = vmatpush1.bf16.xpose.msra.mxu0 0
        %1001 = vmatprep.subr.bf16.mxu0 0
        %1002 = vmatpush1.bf16.xpose.msra.mxu0 0
        %1003 = vmatprep.subr.bf16.mxu0 0
        %1004 = vmatpush1.bf16.xpose.msra.mxu0 0
        %1005 = vmatprep.subr.bf16.mxu0 0
        %1006 = vmatpush1.bf16.xpose.msra.mxu0 0
        %1007 = vmatprep.subr.bf16.mxu0 0
        %1008 = vmatpush1.bf16.xpose.msra.mxu0 0
        %1009 = vmatprep.subr.bf16.mxu0 0
        %1010 = vmatpush1.bf16.xpose.msra.mxu0 0
        %1011 = vmatprep.subr.bf16.mxu0 0
        %1012 = vmatpush1.bf16.xpose.msra.mxu0 0
        %1013 = vmatprep.subr.bf16.mxu0 0
        %1014 = vmatpush1.bf16.xpose.msra.mxu0 0
        %1015 = vmatprep.subr.bf16.mxu0 0
        %1016 = vmatpush1.bf16.xpose.msra.mxu0 0
        %1017 = vmatprep.subr.bf16.mxu0 0
        %1018 = vmatpush1.bf16.xpose.msra.mxu0 0
        %1019 = vmatprep.subr.bf16.mxu0 0
        %1020 = vmatpush1.bf16.xpose.msra.mxu0 0
        %1021 = vmatprep.subr.bf16.mxu0 0
        %1022 = vmatpush1.bf16.xpose.msra.mxu0 0
        %1023 = vmatprep.subr.bf16.mxu0 0
        %1024 = vmatpush1.bf16.xpose.msra.mxu0 0
        %1025 = vmatprep.subr.bf16.mxu0 0
        %1026 = vmatpush1.bf16.xpose.msra.mxu0 0
        %1027 = vmatprep.subr.bf16.mxu0 0
        %1028 = vmatpush1.bf16.xpose.msra.mxu0 0
        %1029 = vmatprep.mubr.bf16.mxu0 0
        %1030 = vmatmul.mubr.bf16.gmra.mrb[0].mxu0 %v992
        %v1031 = vpop.f32.mrb[0].mxu0
        %v1032 = vadd.f32 %v871, %v1031
        %v1033 = vpop.f32.mrb[0].mxu0
        %v1034 = vpop.f32.mrb[0].mxu0
        %v1035 = vpop.f32.mrb[0].mxu0
        %1036 = vdwg.mxu0
        %v1037 = vsel %vm876, %v1032, -inf
        %1038 = vmax.xlane.f32.xlu0 %v1037
        %v1039 = vpop.xlane.xlu0 %1038
        %v1040 = vsub.f32 %v1032, %v1039
        %v1041 = vmul.f32 %v1040, 1.442695
        %v1042 = vpow.pop %v1041
        %v1043 = vsel %vm876, %v1042, 0.0
        %1044 = vadd.xlane.f32.xlu0 %v1043
        %v1045 = vpop.xlane.xlu0 %1044
        %v1046 = vrcp.pop %v1045
        %v1047 = vmul.f32 %v1042, %v1046
        %v1048 = vpack.c.bf16 %v1047, %v1047
        %1049 = vrot.lane.b32.xlu0 %v866, 56
        %v1050 = vpop.permute.xlu0 %1049
        %v1052 = vsel %vm876, %v1048, 0
        %v1055 = vsel %vm940, %v1050, 0
        %1057 = vmatprep.subr.bf16.mxu0 0
        %1058 = vmatpush1.bf16.msra.mxu0 %v1055
        %1059 = vmatprep.subr.bf16.mxu0 0
        %1060 = vmatpush1.bf16.msra.mxu0 0
        %1061 = vmatprep.subr.bf16.mxu0 0
        %1062 = vmatpush1.bf16.msra.mxu0 0
        %1063 = vmatprep.subr.bf16.mxu0 0
        %1064 = vmatpush1.bf16.msra.mxu0 0
        %1065 = vmatprep.subr.bf16.mxu0 0
        %1066 = vmatpush1.bf16.msra.mxu0 0
        %1067 = vmatprep.subr.bf16.mxu0 0
        %1068 = vmatpush1.bf16.msra.mxu0 0
        %1069 = vmatprep.subr.bf16.mxu0 0
        %1070 = vmatpush1.bf16.msra.mxu0 0
        %1071 = vmatprep.subr.bf16.mxu0 0
        %1072 = vmatpush1.bf16.msra.mxu0 0
        %1073 = vmatprep.subr.bf16.mxu0 0
        %1074 = vmatpush1.bf16.msra.mxu0 0
        %1075 = vmatprep.subr.bf16.mxu0 0
        %1076 = vmatpush1.bf16.msra.mxu0 0
        %1077 = vmatprep.subr.bf16.mxu0 0
        %1078 = vmatpush1.bf16.msra.mxu0 0
        %1079 = vmatprep.subr.bf16.mxu0 0
        %1080 = vmatpush1.bf16.msra.mxu0 0
        %1081 = vmatprep.subr.bf16.mxu0 0
        %1082 = vmatpush1.bf16.msra.mxu0 0
        %1083 = vmatprep.subr.bf16.mxu0 0
        %1084 = vmatpush1.bf16.msra.mxu0 0
        %1085 = vmatprep.subr.bf16.mxu0 0
        %1086 = vmatpush1.bf16.msra.mxu0 0
        %1087 = vmatprep.subr.bf16.mxu0 0
        %1088 = vmatpush1.bf16.msra.mxu0 0
        %1089 = vmatprep.mubr.bf16.mxu0 0
        %1090 = vmatmul.mubr.bf16.gmra.mrb[0].mxu0 %v1052
        %v1091 = vpop.f32.mrb[0].mxu0
        %v1092 = vadd.f32 0.0, %v1091
        %v1093 = vpop.f32.mrb[0].mxu0
        %v1094 = vpop.f32.mrb[0].mxu0
        %v1095 = vpop.f32.mrb[0].mxu0
        %1096 = vdwg.mxu0
        %v1097 = vpack.c.bf16 %v1092, %v1092
        %1099 = vrot.lane.b32.xlu0 %v1097, 8
        %v1100 = vpop.permute.xlu0 %1099
        %vm1102 = vcmask 126016
        %1103 = vst.msk [vmem:[#allocation3] sm:$0xf] %vm1102, %v1100
        %1104 = vrot.lane.b32.xlu0 %v866, 112
        %v1105 = vpop.permute.xlu0 %1104
        %1106 = vrot.lane.b32.xlu0 %v866, 80
        %v1107 = vpop.permute.xlu0 %1106
        %v1109 = vsel %vm876, %v1105, 0
        %v1112 = vsel %vm876, %v1107, 0
        %1114 = vmatprep.subr.bf16.mxu0 0
        %1115 = vmatpush1.bf16.xpose.msra.mxu0 %v1112
        %1116 = vmatprep.subr.bf16.mxu0 0
        %1117 = vmatpush1.bf16.xpose.msra.mxu0 0
        %1118 = vmatprep.subr.bf16.mxu0 0
        %1119 = vmatpush1.bf16.xpose.msra.mxu0 0
        %1120 = vmatprep.subr.bf16.mxu0 0
        %1121 = vmatpush1.bf16.xpose.msra.mxu0 0
        %1122 = vmatprep.subr.bf16.mxu0 0
        %1123 = vmatpush1.bf16.xpose.msra.mxu0 0
        %1124 = vmatprep.subr.bf16.mxu0 0
        %1125 = vmatpush1.bf16.xpose.msra.mxu0 0
        %1126 = vmatprep.subr.bf16.mxu0 0
        %1127 = vmatpush1.bf16.xpose.msra.mxu0 0
        %1128 = vmatprep.subr.bf16.mxu0 0
        %1129 = vmatpush1.bf16.xpose.msra.mxu0 0
        %1130 = vmatprep.subr.bf16.mxu0 0
        %1131 = vmatpush1.bf16.xpose.msra.mxu0 0
        %1132 = vmatprep.subr.bf16.mxu0 0
        %1133 = vmatpush1.bf16.xpose.msra.mxu0 0
        %1134 = vmatprep.subr.bf16.mxu0 0
        %1135 = vmatpush1.bf16.xpose.msra.mxu0 0
        %1136 = vmatprep.subr.bf16.mxu0 0
        %1137 = vmatpush1.bf16.xpose.msra.mxu0 0
        %1138 = vmatprep.subr.bf16.mxu0 0
        %1139 = vmatpush1.bf16.xpose.msra.mxu0 0
        %1140 = vmatprep.subr.bf16.mxu0 0
        %1141 = vmatpush1.bf16.xpose.msra.mxu0 0
        %1142 = vmatprep.subr.bf16.mxu0 0
        %1143 = vmatpush1.bf16.xpose.msra.mxu0 0
        %1144 = vmatprep.subr.bf16.mxu0 0
        %1145 = vmatpush1.bf16.xpose.msra.mxu0 0
        %1146 = vmatprep.mubr.bf16.mxu0 0
        %1147 = vmatmul.mubr.bf16.gmra.mrb[0].mxu0 %v1109
        %v1148 = vpop.f32.mrb[0].mxu0
        %v1149 = vadd.f32 %v871, %v1148
        %v1150 = vpop.f32.mrb[0].mxu0
        %v1151 = vpop.f32.mrb[0].mxu0
        %v1152 = vpop.f32.mrb[0].mxu0
        %1153 = vdwg.mxu0
        %v1154 = vsel %vm876, %v1149, -inf
        %1155 = vmax.xlane.f32.xlu0 %v1154
        %v1156 = vpop.xlane.xlu0 %1155
        %v1157 = vsub.f32 %v1149, %v1156
        %v1158 = vmul.f32 %v1157, 1.442695
        %v1159 = vpow.pop %v1158
        %v1160 = vsel %vm876, %v1159, 0.0
        %1161 = vadd.xlane.f32.xlu0 %v1160
        %v1162 = vpop.xlane.xlu0 %1161
        %v1163 = vrcp.pop %v1162
        %v1164 = vmul.f32 %v1159, %v1163
        %v1165 = vpack.c.bf16 %v1164, %v1164
        %1166 = vrot.lane.b32.xlu0 %v866, 48
        %v1167 = vpop.permute.xlu0 %1166
        %v1169 = vsel %vm876, %v1165, 0
        %v1172 = vsel %vm940, %v1167, 0
        %1174 = vmatprep.subr.bf16.mxu0 0
        %1175 = vmatpush1.bf16.msra.mxu0 %v1172
        %1176 = vmatprep.subr.bf16.mxu0 0
        %1177 = vmatpush1.bf16.msra.mxu0 0
        %1178 = vmatprep.subr.bf16.mxu0 0
        %1179 = vmatpush1.bf16.msra.mxu0 0
        %1180 = vmatprep.subr.bf16.mxu0 0
        %1181 = vmatpush1.bf16.msra.mxu0 0
        %1182 = vmatprep.subr.bf16.mxu0 0
        %1183 = vmatpush1.bf16.msra.mxu0 0
        %1184 = vmatprep.subr.bf16.mxu0 0
        %1185 = vmatpush1.bf16.msra.mxu0 0
        %1186 = vmatprep.subr.bf16.mxu0 0
        %1187 = vmatpush1.bf16.msra.mxu0 0
        %1188 = vmatprep.subr.bf16.mxu0 0
        %1189 = vmatpush1.bf16.msra.mxu0 0
        %1190 = vmatprep.subr.bf16.mxu0 0
        %1191 = vmatpush1.bf16.msra.mxu0 0
        %1192 = vmatprep.subr.bf16.mxu0 0
        %1193 = vmatpush1.bf16.msra.mxu0 0
        %1194 = vmatprep.subr.bf16.mxu0 0
        %1195 = vmatpush1.bf16.msra.mxu0 0
        %1196 = vmatprep.subr.bf16.mxu0 0
        %1197 = vmatpush1.bf16.msra.mxu0 0
        %1198 = vmatprep.subr.bf16.mxu0 0
        %1199 = vmatpush1.bf16.msra.mxu0 0
        %1200 = vmatprep.subr.bf16.mxu0 0
        %1201 = vmatpush1.bf16.msra.mxu0 0
        %1202 = vmatprep.subr.bf16.mxu0 0
        %1203 = vmatpush1.bf16.msra.mxu0 0
        %1204 = vmatprep.subr.bf16.mxu0 0
        %1205 = vmatpush1.bf16.msra.mxu0 0
        %1206 = vmatprep.mubr.bf16.mxu0 0
        %1207 = vmatmul.mubr.bf16.gmra.mrb[0].mxu0 %v1169
        %v1208 = vpop.f32.mrb[0].mxu0
        %v1209 = vadd.f32 0.0, %v1208
        %v1210 = vpop.f32.mrb[0].mxu0
        %v1211 = vpop.f32.mrb[0].mxu0
        %v1212 = vpop.f32.mrb[0].mxu0
        %1213 = vdwg.mxu0
        %v1214 = vpack.c.bf16 %v1209, %v1209
        %1216 = vrot.lane.b32.xlu0 %v1214, 16
        %v1217 = vpop.permute.xlu0 %1216
        %vm1219 = vcmask 191616
        %1220 = vst.msk [vmem:[#allocation3] sm:$0xf] %vm1219, %v1217
        %1221 = vrot.lane.b32.xlu0 %v866, 104
        %v1222 = vpop.permute.xlu0 %1221
        %1223 = vrot.lane.b32.xlu0 %v866, 72
        %v1224 = vpop.permute.xlu0 %1223
        %v1226 = vsel %vm876, %v1222, 0
        %v1229 = vsel %vm876, %v1224, 0
        %1231 = vmatprep.subr.bf16.mxu0 0
        %1232 = vmatpush1.bf16.xpose.msra.mxu0 %v1229
        %1233 = vmatprep.subr.bf16.mxu0 0
        %1234 = vmatpush1.bf16.xpose.msra.mxu0 0
        %1235 = vmatprep.subr.bf16.mxu0 0
        %1236 = vmatpush1.bf16.xpose.msra.mxu0 0
        %1237 = vmatprep.subr.bf16.mxu0 0
        %1238 = vmatpush1.bf16.xpose.msra.mxu0 0
        %1239 = vmatprep.subr.bf16.mxu0 0
        %1240 = vmatpush1.bf16.xpose.msra.mxu0 0
        %1241 = vmatprep.subr.bf16.mxu0 0
        %1242 = vmatpush1.bf16.xpose.msra.mxu0 0
        %1243 = vmatprep.subr.bf16.mxu0 0
        %1244 = vmatpush1.bf16.xpose.msra.mxu0 0
        %1245 = vmatprep.subr.bf16.mxu0 0
        %1246 = vmatpush1.bf16.xpose.msra.mxu0 0
        %1247 = vmatprep.subr.bf16.mxu0 0
        %1248 = vmatpush1.bf16.xpose.msra.mxu0 0
        %1249 = vmatprep.subr.bf16.mxu0 0
        %1250 = vmatpush1.bf16.xpose.msra.mxu0 0
        %1251 = vmatprep.subr.bf16.mxu0 0
        %1252 = vmatpush1.bf16.xpose.msra.mxu0 0
        %1253 = vmatprep.subr.bf16.mxu0 0
        %1254 = vmatpush1.bf16.xpose.msra.mxu0 0
        %1255 = vmatprep.subr.bf16.mxu0 0
        %1256 = vmatpush1.bf16.xpose.msra.mxu0 0
        %1257 = vmatprep.subr.bf16.mxu0 0
        %1258 = vmatpush1.bf16.xpose.msra.mxu0 0
        %1259 = vmatprep.subr.bf16.mxu0 0
        %1260 = vmatpush1.bf16.xpose.msra.mxu0 0
        %1261 = vmatprep.subr.bf16.mxu0 0
        %1262 = vmatpush1.bf16.xpose.msra.mxu0 0
        %1263 = vmatprep.mubr.bf16.mxu0 0
        %1264 = vmatmul.mubr.bf16.gmra.mrb[0].mxu0 %v1226
        %v1265 = vpop.f32.mrb[0].mxu0
        %v1266 = vadd.f32 %v871, %v1265
        %v1267 = vpop.f32.mrb[0].mxu0
        %v1268 = vpop.f32.mrb[0].mxu0
        %v1269 = vpop.f32.mrb[0].mxu0
        %1270 = vdwg.mxu0
        %v1271 = vsel %vm876, %v1266, -inf
        %1272 = vmax.xlane.f32.xlu0 %v1271
        %v1273 = vpop.xlane.xlu0 %1272
        %v1274 = vsub.f32 %v1266, %v1273
        %v1275 = vmul.f32 %v1274, 1.442695
        %v1276 = vpow.pop %v1275
        %v1277 = vsel %vm876, %v1276, 0.0
        %1278 = vadd.xlane.f32.xlu0 %v1277
        %v1279 = vpop.xlane.xlu0 %1278
        %v1280 = vrcp.pop %v1279
        %v1281 = vmul.f32 %v1276, %v1280
        %v1282 = vpack.c.bf16 %v1281, %v1281
        %1283 = vrot.lane.b32.xlu0 %v866, 40
        %v1284 = vpop.permute.xlu0 %1283
        %v1286 = vsel %vm876, %v1282, 0
        %v1289 = vsel %vm940, %v1284, 0
        %1291 = vmatprep.subr.bf16.mxu0 0
        %1292 = vmatpush1.bf16.msra.mxu0 %v1289
        %1293 = vmatprep.subr.bf16.mxu0 0
        %1294 = vmatpush1.bf16.msra.mxu0 0
        %1295 = vmatprep.subr.bf16.mxu0 0
        %1296 = vmatpush1.bf16.msra.mxu0 0
        %1297 = vmatprep.subr.bf16.mxu0 0
        %1298 = vmatpush1.bf16.msra.mxu0 0
        %1299 = vmatprep.subr.bf16.mxu0 0
        %1300 = vmatpush1.bf16.msra.mxu0 0
        %1301 = vmatprep.subr.bf16.mxu0 0
        %1302 = vmatpush1.bf16.msra.mxu0 0
        %1303 = vmatprep.subr.bf16.mxu0 0
        %1304 = vmatpush1.bf16.msra.mxu0 0
        %1305 = vmatprep.subr.bf16.mxu0 0
        %1306 = vmatpush1.bf16.msra.mxu0 0
        %1307 = vmatprep.subr.bf16.mxu0 0
        %1308 = vmatpush1.bf16.msra.mxu0 0
        %1309 = vmatprep.subr.bf16.mxu0 0
        %1310 = vmatpush1.bf16.msra.mxu0 0
        %1311 = vmatprep.subr.bf16.mxu0 0
        %1312 = vmatpush1.bf16.msra.mxu0 0
        %1313 = vmatprep.subr.bf16.mxu0 0
        %1314 = vmatpush1.bf16.msra.mxu0 0
        %1315 = vmatprep.subr.bf16.mxu0 0
        %1316 = vmatpush1.bf16.msra.mxu0 0
        %1317 = vmatprep.subr.bf16.mxu0 0
        %1318 = vmatpush1.bf16.msra.mxu0 0
        %1319 = vmatprep.subr.bf16.mxu0 0
        %1320 = vmatpush1.bf16.msra.mxu0 0
        %1321 = vmatprep.subr.bf16.mxu0 0
        %1322 = vmatpush1.bf16.msra.mxu0 0
        %1323 = vmatprep.mubr.bf16.mxu0 0
        %1324 = vmatmul.mubr.bf16.gmra.mrb[0].mxu0 %v1286
        %v1325 = vpop.f32.mrb[0].mxu0
        %v1326 = vadd.f32 0.0, %v1325
        %v1327 = vpop.f32.mrb[0].mxu0
        %v1328 = vpop.f32.mrb[0].mxu0
        %v1329 = vpop.f32.mrb[0].mxu0
        %1330 = vdwg.mxu0
        %v1331 = vpack.c.bf16 %v1326, %v1326
        %1333 = vrot.lane.b32.xlu0 %v1331, 24
        %v1334 = vpop.permute.xlu0 %1333
        %vm1336 = vcmask 257216
        %1337 = vst.msk [vmem:[#allocation3] sm:$0xf] %vm1336, %v1334
        %s1338 = scalar_lea.vmem %s692, 1
        %v1339 = vld [vmem:[%s1338] sm:$0x1]
        %v1340 = vpack.c.bf16 %v862, %v862
        %v1342 = vlaneseq
        %v1343 = vshrl.u32 %v1342, 7
        %v1344 = vsub.s32 0, %v1343
        %v1345 = vrot.slane %v1339, %v1344
        %1348 = vrot.lane.b32.xlu0 %v1340, 96
        %v1349 = vpop.permute.xlu0 %1348
        %v1351 = vsel %vm876, %v1340, 0
        %v1354 = vsel %vm876, %v1349, 0
        %1356 = vmatprep.subr.bf16.mxu0 0
        %1357 = vmatpush1.bf16.xpose.msra.mxu0 %v1354
        %1358 = vmatprep.subr.bf16.mxu0 0
        %1359 = vmatpush1.bf16.xpose.msra.mxu0 0
        %1360 = vmatprep.subr.bf16.mxu0 0
        %1361 = vmatpush1.bf16.xpose.msra.mxu0 0
        %1362 = vmatprep.subr.bf16.mxu0 0
        %1363 = vmatpush1.bf16.xpose.msra.mxu0 0
        %1364 = vmatprep.subr.bf16.mxu0 0
        %1365 = vmatpush1.bf16.xpose.msra.mxu0 0
        %1366 = vmatprep.subr.bf16.mxu0 0
        %1367 = vmatpush1.bf16.xpose.msra.mxu0 0
        %1368 = vmatprep.subr.bf16.mxu0 0
        %1369 = vmatpush1.bf16.xpose.msra.mxu0 0
        %1370 = vmatprep.subr.bf16.mxu0 0
        %1371 = vmatpush1.bf16.xpose.msra.mxu0 0
        %1372 = vmatprep.subr.bf16.mxu0 0
        %1373 = vmatpush1.bf16.xpose.msra.mxu0 0
        %1374 = vmatprep.subr.bf16.mxu0 0
        %1375 = vmatpush1.bf16.xpose.msra.mxu0 0
        %1376 = vmatprep.subr.bf16.mxu0 0
        %1377 = vmatpush1.bf16.xpose.msra.mxu0 0
        %1378 = vmatprep.subr.bf16.mxu0 0
        %1379 = vmatpush1.bf16.xpose.msra.mxu0 0
        %1380 = vmatprep.subr.bf16.mxu0 0
        %1381 = vmatpush1.bf16.xpose.msra.mxu0 0
        %1382 = vmatprep.subr.bf16.mxu0 0
        %1383 = vmatpush1.bf16.xpose.msra.mxu0 0
        %1384 = vmatprep.subr.bf16.mxu0 0
        %1385 = vmatpush1.bf16.xpose.msra.mxu0 0
        %1386 = vmatprep.subr.bf16.mxu0 0
        %1387 = vmatpush1.bf16.xpose.msra.mxu0 0
        %1388 = vmatprep.mubr.bf16.mxu0 0
        %1389 = vmatmul.mubr.bf16.gmra.mrb[0].mxu0 %v1351
        %v1390 = vpop.f32.mrb[0].mxu0
        %v1391 = vadd.f32 %v1345, %v1390
        %v1392 = vpop.f32.mrb[0].mxu0
        %v1393 = vpop.f32.mrb[0].mxu0
        %v1394 = vpop.f32.mrb[0].mxu0
        %1395 = vdwg.mxu0
        %v1396 = vsel %vm876, %v1391, -inf
        %1397 = vmax.xlane.f32.xlu0 %v1396
        %v1398 = vpop.xlane.xlu0 %1397
        %v1399 = vsub.f32 %v1391, %v1398
        %v1400 = vmul.f32 %v1399, 1.442695
        %v1401 = vpow.pop %v1400
        %v1402 = vsel %vm876, %v1401, 0.0
        %1403 = vadd.xlane.f32.xlu0 %v1402
        %v1404 = vpop.xlane.xlu0 %1403
        %v1405 = vrcp.pop %v1404
        %v1406 = vmul.f32 %v1401, %v1405
        %v1407 = vpack.c.bf16 %v1406, %v1406
        %1408 = vrot.lane.b32.xlu0 %v1340, 64
        %v1409 = vpop.permute.xlu0 %1408
        %v1411 = vsel %vm876, %v1407, 0
        %v1414 = vsel %vm940, %v1409, 0
        %1416 = vmatprep.subr.bf16.mxu0 0
        %1417 = vmatpush1.bf16.msra.mxu0 %v1414
        %1418 = vmatprep.subr.bf16.mxu0 0
        %1419 = vmatpush1.bf16.msra.mxu0 0
        %1420 = vmatprep.subr.bf16.mxu0 0
        %1421 = vmatpush1.bf16.msra.mxu0 0
        %1422 = vmatprep.subr.bf16.mxu0 0
        %1423 = vmatpush1.bf16.msra.mxu0 0
        %1424 = vmatprep.subr.bf16.mxu0 0
        %1425 = vmatpush1.bf16.msra.mxu0 0
        %1426 = vmatprep.subr.bf16.mxu0 0
        %1427 = vmatpush1.bf16.msra.mxu0 0
        %1428 = vmatprep.subr.bf16.mxu0 0
        %1429 = vmatpush1.bf16.msra.mxu0 0
        %1430 = vmatprep.subr.bf16.mxu0 0
        %1431 = vmatpush1.bf16.msra.mxu0 0
        %1432 = vmatprep.subr.bf16.mxu0 0
        %1433 = vmatpush1.bf16.msra.mxu0 0
        %1434 = vmatprep.subr.bf16.mxu0 0
        %1435 = vmatpush1.bf16.msra.mxu0 0
        %1436 = vmatprep.subr.bf16.mxu0 0
        %1437 = vmatpush1.bf16.msra.mxu0 0
        %1438 = vmatprep.subr.bf16.mxu0 0
        %1439 = vmatpush1.bf16.msra.mxu0 0
        %1440 = vmatprep.subr.bf16.mxu0 0
        %1441 = vmatpush1.bf16.msra.mxu0 0
        %1442 = vmatprep.subr.bf16.mxu0 0
        %1443 = vmatpush1.bf16.msra.mxu0 0
        %1444 = vmatprep.subr.bf16.mxu0 0
        %1445 = vmatpush1.bf16.msra.mxu0 0
        %1446 = vmatprep.subr.bf16.mxu0 0
        %1447 = vmatpush1.bf16.msra.mxu0 0
        %1448 = vmatprep.mubr.bf16.mxu0 0
        %1449 = vmatmul.mubr.bf16.gmra.mrb[0].mxu0 %v1411
        %v1450 = vpop.f32.mrb[0].mxu0
        %v1451 = vadd.f32 0.0, %v1450
        %v1452 = vpop.f32.mrb[0].mxu0
        %v1453 = vpop.f32.mrb[0].mxu0
        %v1454 = vpop.f32.mrb[0].mxu0
        %1455 = vdwg.mxu0
        %v1456 = vpack.c.bf16 %v1451, %v1451
        %v1458 = vrot.slane %v1456, 4
        %vm1460 = vcmask 64516
        %1461 = vst.msk [vmem:[#allocation3] sm:$0xf0] %vm1460, %v1458
        %1462 = vrot.lane.b32.xlu0 %v1340, 120
        %v1463 = vpop.permute.xlu0 %1462
        %1464 = vrot.lane.b32.xlu0 %v1340, 88
        %v1465 = vpop.permute.xlu0 %1464
        %v1467 = vsel %vm876, %v1463, 0
        %v1470 = vsel %vm876, %v1465, 0
        %1472 = vmatprep.subr.bf16.mxu0 0
        %1473 = vmatpush1.bf16.xpose.msra.mxu0 %v1470
        %1474 = vmatprep.subr.bf16.mxu0 0
        %1475 = vmatpush1.bf16.xpose.msra.mxu0 0
        %1476 = vmatprep.subr.bf16.mxu0 0
        %1477 = vmatpush1.bf16.xpose.msra.mxu0 0
        %1478 = vmatprep.subr.bf16.mxu0 0
        %1479 = vmatpush1.bf16.xpose.msra.mxu0 0
        %1480 = vmatprep.subr.bf16.mxu0 0
        %1481 = vmatpush1.bf16.xpose.msra.mxu0 0
        %1482 = vmatprep.subr.bf16.mxu0 0
        %1483 = vmatpush1.bf16.xpose.msra.mxu0 0
        %1484 = vmatprep.subr.bf16.mxu0 0
        %1485 = vmatpush1.bf16.xpose.msra.mxu0 0
        %1486 = vmatprep.subr.bf16.mxu0 0
        %1487 = vmatpush1.bf16.xpose.msra.mxu0 0
        %1488 = vmatprep.subr.bf16.mxu0 0
        %1489 = vmatpush1.bf16.xpose.msra.mxu0 0
        %1490 = vmatprep.subr.bf16.mxu0 0
        %1491 = vmatpush1.bf16.xpose.msra.mxu0 0
        %1492 = vmatprep.subr.bf16.mxu0 0
        %1493 = vmatpush1.bf16.xpose.msra.mxu0 0
        %1494 = vmatprep.subr.bf16.mxu0 0
        %1495 = vmatpush1.bf16.xpose.msra.mxu0 0
        %1496 = vmatprep.subr.bf16.mxu0 0
        %1497 = vmatpush1.bf16.xpose.msra.mxu0 0
        %1498 = vmatprep.subr.bf16.mxu0 0
        %1499 = vmatpush1.bf16.xpose.msra.mxu0 0
        %1500 = vmatprep.subr.bf16.mxu0 0
        %1501 = vmatpush1.bf16.xpose.msra.mxu0 0
        %1502 = vmatprep.subr.bf16.mxu0 0
        %1503 = vmatpush1.bf16.xpose.msra.mxu0 0
        %1504 = vmatprep.mubr.bf16.mxu0 0
        %1505 = vmatmul.mubr.bf16.gmra.mrb[0].mxu0 %v1467
        %v1506 = vpop.f32.mrb[0].mxu0
        %v1507 = vadd.f32 %v1345, %v1506
        %v1508 = vpop.f32.mrb[0].mxu0
        %v1509 = vpop.f32.mrb[0].mxu0
        %v1510 = vpop.f32.mrb[0].mxu0
        %1511 = vdwg.mxu0
        %v1512 = vsel %vm876, %v1507, -inf
        %1513 = vmax.xlane.f32.xlu0 %v1512
        %v1514 = vpop.xlane.xlu0 %1513
        %v1515 = vsub.f32 %v1507, %v1514
        %v1516 = vmul.f32 %v1515, 1.442695
        %v1517 = vpow.pop %v1516
        %v1518 = vsel %vm876, %v1517, 0.0
        %1519 = vadd.xlane.f32.xlu0 %v1518
        %v1520 = vpop.xlane.xlu0 %1519
        %v1521 = vrcp.pop %v1520
        %v1522 = vmul.f32 %v1517, %v1521
        %v1523 = vpack.c.bf16 %v1522, %v1522
        %1524 = vrot.lane.b32.xlu0 %v1340, 56
        %v1525 = vpop.permute.xlu0 %1524
        %v1527 = vsel %vm876, %v1523, 0
        %v1530 = vsel %vm940, %v1525, 0
        %1532 = vmatprep.subr.bf16.mxu0 0
        %1533 = vmatpush1.bf16.msra.mxu0 %v1530
        %1534 = vmatprep.subr.bf16.mxu0 0
        %1535 = vmatpush1.bf16.msra.mxu0 0
        %1536 = vmatprep.subr.bf16.mxu0 0
        %1537 = vmatpush1.bf16.msra.mxu0 0
        %1538 = vmatprep.subr.bf16.mxu0 0
        %1539 = vmatpush1.bf16.msra.mxu0 0
        %1540 = vmatprep.subr.bf16.mxu0 0
        %1541 = vmatpush1.bf16.msra.mxu0 0
        %1542 = vmatprep.subr.bf16.mxu0 0
        %1543 = vmatpush1.bf16.msra.mxu0 0
        %1544 = vmatprep.subr.bf16.mxu0 0
        %1545 = vmatpush1.bf16.msra.mxu0 0
        %1546 = vmatprep.subr.bf16.mxu0 0
        %1547 = vmatpush1.bf16.msra.mxu0 0
        %1548 = vmatprep.subr.bf16.mxu0 0
        %1549 = vmatpush1.bf16.msra.mxu0 0
        %1550 = vmatprep.subr.bf16.mxu0 0
        %1551 = vmatpush1.bf16.msra.mxu0 0
        %1552 = vmatprep.subr.bf16.mxu0 0
        %1553 = vmatpush1.bf16.msra.mxu0 0
        %1554 = vmatprep.subr.bf16.mxu0 0
        %1555 = vmatpush1.bf16.msra.mxu0 0
        %1556 = vmatprep.subr.bf16.mxu0 0
        %1557 = vmatpush1.bf16.msra.mxu0 0
        %1558 = vmatprep.subr.bf16.mxu0 0
        %1559 = vmatpush1.bf16.msra.mxu0 0
        %1560 = vmatprep.subr.bf16.mxu0 0
        %1561 = vmatpush1.bf16.msra.mxu0 0
        %1562 = vmatprep.subr.bf16.mxu0 0
        %1563 = vmatpush1.bf16.msra.mxu0 0
        %1564 = vmatprep.mubr.bf16.mxu0 0
        %1565 = vmatmul.mubr.bf16.gmra.mrb[0].mxu0 %v1527
        %v1566 = vpop.f32.mrb[0].mxu0
        %v1567 = vadd.f32 0.0, %v1566
        %v1568 = vpop.f32.mrb[0].mxu0
        %v1569 = vpop.f32.mrb[0].mxu0
        %v1570 = vpop.f32.mrb[0].mxu0
        %1571 = vdwg.mxu0
        %v1572 = vpack.c.bf16 %v1567, %v1567
        %v1574 = vrot.slane %v1572, 4
        %1575 = vrot.lane.b32.xlu0 %v1574, 8
        %v1576 = vpop.permute.xlu0 %1575
        %vm1578 = vcmask 130116
        %1579 = vst.msk [vmem:[#allocation3] sm:$0xf0] %vm1578, %v1576
        %1580 = vrot.lane.b32.xlu0 %v1340, 112
        %v1581 = vpop.permute.xlu0 %1580
        %1582 = vrot.lane.b32.xlu0 %v1340, 80
        %v1583 = vpop.permute.xlu0 %1582
        %v1585 = vsel %vm876, %v1581, 0
        %v1588 = vsel %vm876, %v1583, 0
        %1590 = vmatprep.subr.bf16.mxu0 0
        %1591 = vmatpush1.bf16.xpose.msra.mxu0 %v1588
        %1592 = vmatprep.subr.bf16.mxu0 0
        %1593 = vmatpush1.bf16.xpose.msra.mxu0 0
        %1594 = vmatprep.subr.bf16.mxu0 0
        %1595 = vmatpush1.bf16.xpose.msra.mxu0 0
        %1596 = vmatprep.subr.bf16.mxu0 0
        %1597 = vmatpush1.bf16.xpose.msra.mxu0 0
        %1598 = vmatprep.subr.bf16.mxu0 0
        %1599 = vmatpush1.bf16.xpose.msra.mxu0 0
        %1600 = vmatprep.subr.bf16.mxu0 0
        %1601 = vmatpush1.bf16.xpose.msra.mxu0 0
        %1602 = vmatprep.subr.bf16.mxu0 0
        %1603 = vmatpush1.bf16.xpose.msra.mxu0 0
        %1604 = vmatprep.subr.bf16.mxu0 0
        %1605 = vmatpush1.bf16.xpose.msra.mxu0 0
        %1606 = vmatprep.subr.bf16.mxu0 0
        %1607 = vmatpush1.bf16.xpose.msra.mxu0 0
        %1608 = vmatprep.subr.bf16.mxu0 0
        %1609 = vmatpush1.bf16.xpose.msra.mxu0 0
        %1610 = vmatprep.subr.bf16.mxu0 0
        %1611 = vmatpush1.bf16.xpose.msra.mxu0 0
        %1612 = vmatprep.subr.bf16.mxu0 0
        %1613 = vmatpush1.bf16.xpose.msra.mxu0 0
        %1614 = vmatprep.subr.bf16.mxu0 0
        %1615 = vmatpush1.bf16.xpose.msra.mxu0 0
        %1616 = vmatprep.subr.bf16.mxu0 0
        %1617 = vmatpush1.bf16.xpose.msra.mxu0 0
        %1618 = vmatprep.subr.bf16.mxu0 0
        %1619 = vmatpush1.bf16.xpose.msra.mxu0 0
        %1620 = vmatprep.subr.bf16.mxu0 0
        %1621 = vmatpush1.bf16.xpose.msra.mxu0 0
        %1622 = vmatprep.mubr.bf16.mxu0 0
        %1623 = vmatmul.mubr.bf16.gmra.mrb[0].mxu0 %v1585
        %v1624 = vpop.f32.mrb[0].mxu0
        %v1625 = vadd.f32 %v1345, %v1624
        %v1626 = vpop.f32.mrb[0].mxu0
        %v1627 = vpop.f32.mrb[0].mxu0
        %v1628 = vpop.f32.mrb[0].mxu0
        %1629 = vdwg.mxu0
        %v1630 = vsel %vm876, %v1625, -inf
        %1631 = vmax.xlane.f32.xlu0 %v1630
        %v1632 = vpop.xlane.xlu0 %1631
        %v1633 = vsub.f32 %v1625, %v1632
        %v1634 = vmul.f32 %v1633, 1.442695
        %v1635 = vpow.pop %v1634
        %v1636 = vsel %vm876, %v1635, 0.0
        %1637 = vadd.xlane.f32.xlu0 %v1636
        %v1638 = vpop.xlane.xlu0 %1637
        %v1639 = vrcp.pop %v1638
        %v1640 = vmul.f32 %v1635, %v1639
        %v1641 = vpack.c.bf16 %v1640, %v1640
        %1642 = vrot.lane.b32.xlu0 %v1340, 48
        %v1643 = vpop.permute.xlu0 %1642
        %v1645 = vsel %vm876, %v1641, 0
        %v1648 = vsel %vm940, %v1643, 0
        %1650 = vmatprep.subr.bf16.mxu0 0
        %1651 = vmatpush1.bf16.msra.mxu0 %v1648
        %1652 = vmatprep.subr.bf16.mxu0 0
        %1653 = vmatpush1.bf16.msra.mxu0 0
        %1654 = vmatprep.subr.bf16.mxu0 0
        %1655 = vmatpush1.bf16.msra.mxu0 0
        %1656 = vmatprep.subr.bf16.mxu0 0
        %1657 = vmatpush1.bf16.msra.mxu0 0
        %1658 = vmatprep.subr.bf16.mxu0 0
        %1659 = vmatpush1.bf16.msra.mxu0 0
        %1660 = vmatprep.subr.bf16.mxu0 0
        %1661 = vmatpush1.bf16.msra.mxu0 0
        %1662 = vmatprep.subr.bf16.mxu0 0
        %1663 = vmatpush1.bf16.msra.mxu0 0
        %1664 = vmatprep.subr.bf16.mxu0 0
        %1665 = vmatpush1.bf16.msra.mxu0 0
        %1666 = vmatprep.subr.bf16.mxu0 0
        %1667 = vmatpush1.bf16.msra.mxu0 0
        %1668 = vmatprep.subr.bf16.mxu0 0
        %1669 = vmatpush1.bf16.msra.mxu0 0
        %1670 = vmatprep.subr.bf16.mxu0 0
        %1671 = vmatpush1.bf16.msra.mxu0 0
        %1672 = vmatprep.subr.bf16.mxu0 0
        %1673 = vmatpush1.bf16.msra.mxu0 0
        %1674 = vmatprep.subr.bf16.mxu0 0
        %1675 = vmatpush1.bf16.msra.mxu0 0
        %1676 = vmatprep.subr.bf16.mxu0 0
        %1677 = vmatpush1.bf16.msra.mxu0 0
        %1678 = vmatprep.subr.bf16.mxu0 0
        %1679 = vmatpush1.bf16.msra.mxu0 0
        %1680 = vmatprep.subr.bf16.mxu0 0
        %1681 = vmatpush1.bf16.msra.mxu0 0
        %1682 = vmatprep.mubr.bf16.mxu0 0
        %1683 = vmatmul.mubr.bf16.gmra.mrb[0].mxu0 %v1645
        %v1684 = vpop.f32.mrb[0].mxu0
        %v1685 = vadd.f32 0.0, %v1684
        %v1686 = vpop.f32.mrb[0].mxu0
        %v1687 = vpop.f32.mrb[0].mxu0
        %v1688 = vpop.f32.mrb[0].mxu0
        %1689 = vdwg.mxu0
        %v1690 = vpack.c.bf16 %v1685, %v1685
        %v1692 = vrot.slane %v1690, 4
        %1693 = vrot.lane.b32.xlu0 %v1692, 16
        %v1694 = vpop.permute.xlu0 %1693
        %vm1696 = vcmask 195716
        %1697 = vst.msk [vmem:[#allocation3] sm:$0xf0] %vm1696, %v1694
        %1698 = vrot.lane.b32.xlu0 %v1340, 104
        %v1699 = vpop.permute.xlu0 %1698
        %1700 = vrot.lane.b32.xlu0 %v1340, 72
        %v1701 = vpop.permute.xlu0 %1700
        %v1703 = vsel %vm876, %v1699, 0
        %v1706 = vsel %vm876, %v1701, 0
        %1708 = vmatprep.subr.bf16.mxu0 0
        %1709 = vmatpush1.bf16.xpose.msra.mxu0 %v1706
        %1710 = vmatprep.subr.bf16.mxu0 0
        %1711 = vmatpush1.bf16.xpose.msra.mxu0 0
        %1712 = vmatprep.subr.bf16.mxu0 0
        %1713 = vmatpush1.bf16.xpose.msra.mxu0 0
        %1714 = vmatprep.subr.bf16.mxu0 0
        %1715 = vmatpush1.bf16.xpose.msra.mxu0 0
        %1716 = vmatprep.subr.bf16.mxu0 0
        %1717 = vmatpush1.bf16.xpose.msra.mxu0 0
        %1718 = vmatprep.subr.bf16.mxu0 0
        %1719 = vmatpush1.bf16.xpose.msra.mxu0 0
        %1720 = vmatprep.subr.bf16.mxu0 0
        %1721 = vmatpush1.bf16.xpose.msra.mxu0 0
        %1722 = vmatprep.subr.bf16.mxu0 0
        %1723 = vmatpush1.bf16.xpose.msra.mxu0 0
        %1724 = vmatprep.subr.bf16.mxu0 0
        %1725 = vmatpush1.bf16.xpose.msra.mxu0 0
        %1726 = vmatprep.subr.bf16.mxu0 0
        %1727 = vmatpush1.bf16.xpose.msra.mxu0 0
        %1728 = vmatprep.subr.bf16.mxu0 0
        %1729 = vmatpush1.bf16.xpose.msra.mxu0 0
        %1730 = vmatprep.subr.bf16.mxu0 0
        %1731 = vmatpush1.bf16.xpose.msra.mxu0 0
        %1732 = vmatprep.subr.bf16.mxu0 0
        %1733 = vmatpush1.bf16.xpose.msra.mxu0 0
        %1734 = vmatprep.subr.bf16.mxu0 0
        %1735 = vmatpush1.bf16.xpose.msra.mxu0 0
        %1736 = vmatprep.subr.bf16.mxu0 0
        %1737 = vmatpush1.bf16.xpose.msra.mxu0 0
        %1738 = vmatprep.subr.bf16.mxu0 0
        %1739 = vmatpush1.bf16.xpose.msra.mxu0 0
        %1740 = vmatprep.mubr.bf16.mxu0 0
        %1741 = vmatmul.mubr.bf16.gmra.mrb[0].mxu0 %v1703
        %v1742 = vpop.f32.mrb[0].mxu0
        %v1743 = vadd.f32 %v1345, %v1742
        %v1744 = vpop.f32.mrb[0].mxu0
        %v1745 = vpop.f32.mrb[0].mxu0
        %v1746 = vpop.f32.mrb[0].mxu0
        %1747 = vdwg.mxu0
        %v1748 = vsel %vm876, %v1743, -inf
        %1749 = vmax.xlane.f32.xlu0 %v1748
        %v1750 = vpop.xlane.xlu0 %1749
        %v1751 = vsub.f32 %v1743, %v1750
        %v1752 = vmul.f32 %v1751, 1.442695
        %v1753 = vpow.pop %v1752
        %v1754 = vsel %vm876, %v1753, 0.0
        %1755 = vadd.xlane.f32.xlu0 %v1754
        %v1756 = vpop.xlane.xlu0 %1755
        %v1757 = vrcp.pop %v1756
        %v1758 = vmul.f32 %v1753, %v1757
        %v1759 = vpack.c.bf16 %v1758, %v1758
        %1760 = vrot.lane.b32.xlu0 %v1340, 40
        %v1761 = vpop.permute.xlu0 %1760
        %v1763 = vsel %vm876, %v1759, 0
        %v1766 = vsel %vm940, %v1761, 0
        %1768 = vmatprep.subr.bf16.mxu0 0
        %1769 = vmatpush1.bf16.msra.mxu0 %v1766
        %1770 = vmatprep.subr.bf16.mxu0 0
        %1771 = vmatpush1.bf16.msra.mxu0 0
        %1772 = vmatprep.subr.bf16.mxu0 0
        %1773 = vmatpush1.bf16.msra.mxu0 0
        %1774 = vmatprep.subr.bf16.mxu0 0
        %1775 = vmatpush1.bf16.msra.mxu0 0
        %1776 = vmatprep.subr.bf16.mxu0 0
        %1777 = vmatpush1.bf16.msra.mxu0 0
        %1778 = vmatprep.subr.bf16.mxu0 0
        %1779 = vmatpush1.bf16.msra.mxu0 0
        %1780 = vmatprep.subr.bf16.mxu0 0
        %1781 = vmatpush1.bf16.msra.mxu0 0
        %1782 = vmatprep.subr.bf16.mxu0 0
        %1783 = vmatpush1.bf16.msra.mxu0 0
        %1784 = vmatprep.subr.bf16.mxu0 0
        %1785 = vmatpush1.bf16.msra.mxu0 0
        %1786 = vmatprep.subr.bf16.mxu0 0
        %1787 = vmatpush1.bf16.msra.mxu0 0
        %1788 = vmatprep.subr.bf16.mxu0 0
        %1789 = vmatpush1.bf16.msra.mxu0 0
        %1790 = vmatprep.subr.bf16.mxu0 0
        %1791 = vmatpush1.bf16.msra.mxu0 0
        %1792 = vmatprep.subr.bf16.mxu0 0
        %1793 = vmatpush1.bf16.msra.mxu0 0
        %1794 = vmatprep.subr.bf16.mxu0 0
        %1795 = vmatpush1.bf16.msra.mxu0 0
        %1796 = vmatprep.subr.bf16.mxu0 0
        %1797 = vmatpush1.bf16.msra.mxu0 0
        %1798 = vmatprep.subr.bf16.mxu0 0
        %1799 = vmatpush1.bf16.msra.mxu0 0
        %1800 = vmatprep.mubr.bf16.mxu0 0
        %1801 = vmatmul.mubr.bf16.gmra.mrb[0].mxu0 %v1763
        %v1802 = vpop.f32.mrb[0].mxu0
        %v1803 = vadd.f32 0.0, %v1802
        %v1804 = vpop.f32.mrb[0].mxu0
        %v1805 = vpop.f32.mrb[0].mxu0
        %v1806 = vpop.f32.mrb[0].mxu0
        %1807 = vdwg.mxu0
        %v1808 = vpack.c.bf16 %v1803, %v1803
        %v1810 = vrot.slane %v1808, 4
        %1811 = vrot.lane.b32.xlu0 %v1810, 24
        %v1812 = vpop.permute.xlu0 %1811
        %vm1814 = vcmask 261316
        %1815 = vst.msk [vmem:[#allocation3] sm:$0xf0] %vm1814, %v1812
        %v1816 = vld [vmem:[#allocation3] sm:$0xff]
        %v1817 = vld [vmem:[%s712] sm:$0xf]
        %v1818 = vld [vmem:[%s712 + $0x4] sm:$0xf]
        %v1819 = vld [vmem:[%s712 + $0x8] sm:$0xf]
        %v1820 = vld [vmem:[%s712 + $0xc] sm:$0xf]
        %v1821 = vld [vmem:[%s715] sm:$0x1]
        %v1823 = vlaneseq
        %v1824 = vshrl.u32 %v1823, 7
        %v1825 = vsub.s32 0, %v1824
        %v1826 = vrot.slane %v1821, %v1825
        %v1832 = vunpack.c.l.b16 %v1817
        %v1833 = vunpack.c.l.b16 %v1818
        %v1834 = vunpack.c.l.b16 %v1819
        %v1835 = vunpack.c.l.b16 %v1820
        %v1836 = vpack.c.b16 %v1833, %v1832
        %v1837 = vpack.c.b16 %v1835, %v1834
        %v1841 = vsel %vm753, %v1816, 0
        %1843 = vmatprep.subr.bf16.mxu0 0
        %1844 = vmatpush1.bf16.msra.mxu0 %v1836
        %1845 = vmatprep.subr.bf16.mxu0 0
        %1846 = vmatpush1.bf16.msra.mxu0 %v1837
        %1847 = vmatprep.subr.bf16.mxu0 0
        %1848 = vmatpush1.bf16.msra.mxu0 0
        %1849 = vmatprep.subr.bf16.mxu0 0
        %1850 = vmatpush1.bf16.msra.mxu0 0
        %1851 = vmatprep.subr.bf16.mxu0 0
        %1852 = vmatpush1.bf16.msra.mxu0 0
        %1853 = vmatprep.subr.bf16.mxu0 0
        %1854 = vmatpush1.bf16.msra.mxu0 0
        %1855 = vmatprep.subr.bf16.mxu0 0
        %1856 = vmatpush1.bf16.msra.mxu0 0
        %1857 = vmatprep.subr.bf16.mxu0 0
        %1858 = vmatpush1.bf16.msra.mxu0 0
        %1859 = vmatprep.subr.bf16.mxu0 0
        %1860 = vmatpush1.bf16.msra.mxu0 0
        %1861 = vmatprep.subr.bf16.mxu0 0
        %1862 = vmatpush1.bf16.msra.mxu0 0
        %1863 = vmatprep.subr.bf16.mxu0 0
        %1864 = vmatpush1.bf16.msra.mxu0 0
        %1865 = vmatprep.subr.bf16.mxu0 0
        %1866 = vmatpush1.bf16.msra.mxu0 0
        %1867 = vmatprep.subr.bf16.mxu0 0
        %1868 = vmatpush1.bf16.msra.mxu0 0
        %1869 = vmatprep.subr.bf16.mxu0 0
        %1870 = vmatpush1.bf16.msra.mxu0 0
        %1871 = vmatprep.subr.bf16.mxu0 0
        %1872 = vmatpush1.bf16.msra.mxu0 0
        %1873 = vmatprep.subr.bf16.mxu0 0
        %1874 = vmatpush1.bf16.msra.mxu0 0
        %1875 = vmatprep.mubr.bf16.mxu0 0
        %1876 = vmatmul.mubr.bf16.gmra.mrb[0].mxu0 %v1841
        %v1877 = vpop.f32.mrb[0].mxu0
        %v1878 = vadd.f32 %v1826, %v1877
        %v1879 = vpop.f32.mrb[0].mxu0
        %v1880 = vpop.f32.mrb[0].mxu0
        %v1881 = vadd.f32 %v1826, %v1880
        %v1882 = vpop.f32.mrb[0].mxu0
        %1883 = vdwg.mxu0
        %v1884 = vadd.f32 %v749, %v1878
        %v1885 = vadd.f32 %v750, %v1881
        %v1886 = vld [vmem:[%s718] sm:$0x1]
        %v1887 = vld [vmem:[%s721] sm:$0x1]
        %v1888 = vsel %vm753, %v1884, 0.0
        %1889 = vadd.xlane.f32.xlu0 %v1888
        %v1890 = vpop.xlane.xlu0 %1889
        %v1891 = vsel %vm753, %v1885, 0.0
        %1892 = vadd.xlane.f32.xlu0 %v1891
        %v1893 = vpop.xlane.xlu0 %1892
        %v1894 = vmul.f32 %v1890, %v760
        %v1895 = vmul.f32 %v1893, %v760
        %v1896 = vsub.f32 %v1884, %v1894
        %v1897 = vsub.f32 %v1885, %v1895
        %v1898 = vmul.f32 %v1896, %v1896
        %v1899 = vmul.f32 %v1897, %v1897
        %v1900 = vsel %vm753, %v1898, 0.0
        %1901 = vadd.xlane.f32.xlu0 %v1900
        %v1902 = vpop.xlane.xlu0 %1901
        %v1903 = vsel %vm753, %v1899, 0.0
        %1904 = vadd.xlane.f32.xlu0 %v1903
        %v1905 = vpop.xlane.xlu0 %1904
        %v1906 = vmul.f32 %v1902, %v760
        %v1907 = vmul.f32 %v1905, %v760
        %v1908 = vadd.f32 %v1906, 1e-06
        %v1909 = vadd.f32 %v1907, 1e-06
        %v1910 = vrsqrt.pop %v1908
        %v1911 = vrsqrt.pop %v1909
        %v1912 = vmul.f32 %v1896, %v1910
        %v1913 = vmul.f32 %v1897, %v1911
        %v1915 = vlaneseq
        %v1916 = vshrl.u32 %v1915, 7
        %v1917 = vsub.s32 0, %v1916
        %v1918 = vrot.slane %v1886, %v1917
        %v1920 = vmul.f32 %v1912, %v1918
        %v1921 = vmul.f32 %v1913, %v1918
        %v1923 = vlaneseq
        %v1924 = vshrl.u32 %v1923, 7
        %v1925 = vsub.s32 0, %v1924
        %v1926 = vrot.slane %v1887, %v1925
        %v1928 = vadd.f32 %v1920, %v1926
        %v1929 = vadd.f32 %v1921, %v1926
        %v1930 = vpack.c.bf16 %v1929, %v1928
        %v1931 = vld [vmem:[%s726] sm:$0xf]
        %v1932 = vld [vmem:[%s726 + $0x4] sm:$0xf]
        %v1933 = vld [vmem:[%s726 + $0x8] sm:$0xf]
        %v1934 = vld [vmem:[%s726 + $0xc] sm:$0xf]
        %v1935 = vld [vmem:[%s729] sm:$0x1]
        %v1937 = vlaneseq
        %v1938 = vshrl.u32 %v1937, 7
        %v1939 = vsub.s32 0, %v1938
        %v1940 = vrot.slane %v1935, %v1939
        %v1946 = vunpack.c.l.b16 %v1931
        %v1947 = vunpack.c.l.b16 %v1932
        %v1948 = vunpack.c.l.b16 %v1933
        %v1949 = vunpack.c.l.b16 %v1934
        %v1950 = vpack.c.b16 %v1947, %v1946
        %v1951 = vpack.c.b16 %v1949, %v1948
        %v1955 = vsel %vm753, %v1930, 0
        %1957 = vmatprep.subr.bf16.mxu0 0
        %1958 = vmatpush1.bf16.msra.mxu0 %v1950
        %1959 = vmatprep.subr.bf16.mxu0 0
        %1960 = vmatpush1.bf16.msra.mxu0 %v1951
        %1961 = vmatprep.subr.bf16.mxu0 0
        %1962 = vmatpush1.bf16.msra.mxu0 0
        %1963 = vmatprep.subr.bf16.mxu0 0
        %1964 = vmatpush1.bf16.msra.mxu0 0
        %1965 = vmatprep.subr.bf16.mxu0 0
        %1966 = vmatpush1.bf16.msra.mxu0 0
        %1967 = vmatprep.subr.bf16.mxu0 0
        %1968 = vmatpush1.bf16.msra.mxu0 0
        %1969 = vmatprep.subr.bf16.mxu0 0
        %1970 = vmatpush1.bf16.msra.mxu0 0
        %1971 = vmatprep.subr.bf16.mxu0 0
        %1972 = vmatpush1.bf16.msra.mxu0 0
        %1973 = vmatprep.subr.bf16.mxu0 0
        %1974 = vmatpush1.bf16.msra.mxu0 0
        %1975 = vmatprep.subr.bf16.mxu0 0
        %1976 = vmatpush1.bf16.msra.mxu0 0
        %1977 = vmatprep.subr.bf16.mxu0 0
        %1978 = vmatpush1.bf16.msra.mxu0 0
        %1979 = vmatprep.subr.bf16.mxu0 0
        %1980 = vmatpush1.bf16.msra.mxu0 0
        %1981 = vmatprep.subr.bf16.mxu0 0
        %1982 = vmatpush1.bf16.msra.mxu0 0
        %1983 = vmatprep.subr.bf16.mxu0 0
        %1984 = vmatpush1.bf16.msra.mxu0 0
        %1985 = vmatprep.subr.bf16.mxu0 0
        %1986 = vmatpush1.bf16.msra.mxu0 0
        %1987 = vmatprep.subr.bf16.mxu0 0
        %1988 = vmatpush1.bf16.msra.mxu0 0
        %1989 = vmatprep.mubr.bf16.mxu0 0
        %1990 = vmatmul.mubr.bf16.gmra.mrb[0].mxu0 %v1955
        %v1991 = vpop.f32.mrb[0].mxu0
        %v1992 = vadd.f32 %v1940, %v1991
        %v1993 = vpop.f32.mrb[0].mxu0
        %v1994 = vpop.f32.mrb[0].mxu0
        %v1995 = vadd.f32 %v1940, %v1994
        %v1996 = vpop.f32.mrb[0].mxu0
        %1997 = vdwg.mxu0
        %v1998 = vmul.f32 %v1992, 0.5
        %v1999 = vmul.f32 %v1995, 0.5
        %v2000 = vmul.f32 %v1992, 0.70710677
        %v2001 = vmul.f32 %v1995, 0.70710677
        %vm2002 = vcmp.ge.f32.partialorder %v2000, 0.0
        %vm2003 = vcmp.ge.f32.partialorder %v2001, 0.0
        %v2004 = vsel %vm2002, 1.0, -1.0
        %v2005 = vsel %vm2003, 1.0, -1.0
        %v2006 = vand.u32 2147483647, %v2000
        %v2007 = vand.u32 2147483647, %v2001
        %v2008 = vmul.f32 %v2006, 0.3275911
        %v2009 = vmul.f32 %v2007, 0.3275911
        %v2010 = vadd.f32 %v2008, 1.0
        %v2011 = vadd.f32 %v2009, 1.0
        %v2012 = vrcp.pop %v2010
        %v2013 = vmul.f32 1.0, %v2012
        %v2014 = vrcp.pop %v2011
        %v2015 = vmul.f32 1.0, %v2014
        %v2016 = vmul.f32 %v2013, 1.0614054
        %v2017 = vmul.f32 %v2015, 1.0614054
        %v2018 = vadd.f32 %v2016, -1.4531521
        %v2019 = vadd.f32 %v2017, -1.4531521
        %v2020 = vmul.f32 %v2018, %v2013
        %v2021 = vmul.f32 %v2019, %v2015
        %v2022 = vadd.f32 %v2020, 1.4214138
        %v2023 = vadd.f32 %v2021, 1.4214138
        %v2024 = vmul.f32 %v2022, %v2013
        %v2025 = vmul.f32 %v2023, %v2015
        %v2026 = vadd.f32 %v2024, -0.28449672
        %v2027 = vadd.f32 %v2025, -0.28449672
        %v2028 = vmul.f32 %v2026, %v2013
        %v2029 = vmul.f32 %v2027, %v2015
        %v2030 = vadd.f32 %v2028, 0.2548296
        %v2031 = vadd.f32 %v2029, 0.2548296
        %v2032 = vmul.f32 %v2030, %v2013
        %v2033 = vmul.f32 %v2031, %v2015
        %v2034 = vsub.f32 0.0, %v2006
        %v2035 = vsub.f32 0.0, %v2007
        %v2036 = vmul.f32 %v2034, %v2006
        %v2037 = vmul.f32 %v2035, %v2007
        %v2038 = vmul.f32 %v2036, 1.442695
        %v2039 = vpow.pop %v2038
        %v2040 = vmul.f32 %v2037, 1.442695
        %v2041 = vpow.pop %v2040
        %v2042 = vmul.f32 %v2032, %v2039
        %v2043 = vmul.f32 %v2033, %v2041
        %v2044 = vsub.f32 1.0, %v2042
        %v2045 = vsub.f32 1.0, %v2043
        %v2046 = vmul.f32 %v2004, %v2044
        %v2047 = vmul.f32 %v2005, %v2045
        %v2048 = vadd.f32 %v2046, 1.0
        %v2049 = vadd.f32 %v2047, 1.0
        %v2050 = vmul.f32 %v1998, %v2048
        %v2051 = vmul.f32 %v1999, %v2049
        %v2052 = vpack.c.bf16 %v2051, %v2050
        %v2053 = vld [vmem:[%s734] sm:$0xf]
        %v2054 = vld [vmem:[%s734 + $0x4] sm:$0xf]
        %v2055 = vld [vmem:[%s734 + $0x8] sm:$0xf]
        %v2056 = vld [vmem:[%s734 + $0xc] sm:$0xf]
        %v2057 = vld [vmem:[%s734 + $0x10] sm:$0xf]
        %v2058 = vld [vmem:[%s734 + $0x14] sm:$0xf]
        %v2059 = vld [vmem:[%s734 + $0x18] sm:$0xf]
        %v2060 = vld [vmem:[%s734 + $0x1c] sm:$0xf]
        %v2061 = vld [vmem:[%s734 + $0x20] sm:$0xf]
        %v2062 = vld [vmem:[%s734 + $0x24] sm:$0xf]
        %v2063 = vld [vmem:[%s734 + $0x28] sm:$0xf]
        %v2064 = vld [vmem:[%s734 + $0x2c] sm:$0xf]
        %v2065 = vld [vmem:[%s734 + $0x30] sm:$0xf]
        %v2066 = vld [vmem:[%s734 + $0x34] sm:$0xf]
        %v2067 = vld [vmem:[%s734 + $0x38] sm:$0xf]
        %v2068 = vld [vmem:[%s734 + $0x3c] sm:$0xf]
        %v2069 = vld [vmem:[%s737] sm:$0x1]
        %v2071 = vlaneseq
        %v2072 = vshrl.u32 %v2071, 7
        %v2073 = vsub.s32 0, %v2072
        %v2074 = vrot.slane %v2069, %v2073
        %v2092 = vunpack.c.l.b16 %v2053
        %v2093 = vunpack.c.l.b16 %v2054
        %v2094 = vunpack.c.l.b16 %v2055
        %v2095 = vunpack.c.l.b16 %v2056
        %v2096 = vunpack.c.l.b16 %v2057
        %v2097 = vunpack.c.l.b16 %v2058
        %v2098 = vunpack.c.l.b16 %v2059
        %v2099 = vunpack.c.l.b16 %v2060
        %v2100 = vunpack.c.l.b16 %v2061
        %v2101 = vunpack.c.l.b16 %v2062
        %v2102 = vunpack.c.l.b16 %v2063
        %v2103 = vunpack.c.l.b16 %v2064
        %v2104 = vunpack.c.l.b16 %v2065
        %v2105 = vunpack.c.l.b16 %v2066
        %v2106 = vunpack.c.l.b16 %v2067
        %v2107 = vunpack.c.l.b16 %v2068
        %v2108 = vpack.c.b16 %v2093, %v2092
        %v2109 = vpack.c.b16 %v2095, %v2094
        %v2110 = vpack.c.b16 %v2097, %v2096
        %v2111 = vpack.c.b16 %v2099, %v2098
        %v2112 = vpack.c.b16 %v2101, %v2100
        %v2113 = vpack.c.b16 %v2103, %v2102
        %v2114 = vpack.c.b16 %v2105, %v2104
        %v2115 = vpack.c.b16 %v2107, %v2106
        %2124 = vmatprep.subr.bf16.mxu0 0
        %2125 = vmatpush1.bf16.msra.mxu0 %v2108
        %2126 = vmatprep.subr.bf16.mxu0 0
        %2127 = vmatpush1.bf16.msra.mxu0 %v2109
        %2128 = vmatprep.subr.bf16.mxu0 0
        %2129 = vmatpush1.bf16.msra.mxu0 %v2110
        %2130 = vmatprep.subr.bf16.mxu0 0
        %2131 = vmatpush1.bf16.msra.mxu0 %v2111
        %2132 = vmatprep.subr.bf16.mxu0 0
        %2133 = vmatpush1.bf16.msra.mxu0 %v2112
        %2134 = vmatprep.subr.bf16.mxu0 0
        %2135 = vmatpush1.bf16.msra.mxu0 %v2113
        %2136 = vmatprep.subr.bf16.mxu0 0
        %2137 = vmatpush1.bf16.msra.mxu0 %v2114
        %2138 = vmatprep.subr.bf16.mxu0 0
        %2139 = vmatpush1.bf16.msra.mxu0 %v2115
        %2140 = vmatprep.subr.bf16.mxu0 0
        %2141 = vmatpush1.bf16.msra.mxu0 0
        %2142 = vmatprep.subr.bf16.mxu0 0
        %2143 = vmatpush1.bf16.msra.mxu0 0
        %2144 = vmatprep.subr.bf16.mxu0 0
        %2145 = vmatpush1.bf16.msra.mxu0 0
        %2146 = vmatprep.subr.bf16.mxu0 0
        %2147 = vmatpush1.bf16.msra.mxu0 0
        %2148 = vmatprep.subr.bf16.mxu0 0
        %2149 = vmatpush1.bf16.msra.mxu0 0
        %2150 = vmatprep.subr.bf16.mxu0 0
        %2151 = vmatpush1.bf16.msra.mxu0 0
        %2152 = vmatprep.subr.bf16.mxu0 0
        %2153 = vmatpush1.bf16.msra.mxu0 0
        %2154 = vmatprep.subr.bf16.mxu0 0
        %2155 = vmatpush1.bf16.msra.mxu0 0
        %2156 = vmatprep.mubr.bf16.mxu0 0
        %2157 = vmatmul.mubr.bf16.gmra.mrb[0].mxu0 %v2052
        %v2158 = vpop.f32.mrb[0].mxu0
        %v2159 = vadd.f32 %v2074, %v2158
        %v2160 = vpop.f32.mrb[0].mxu0
        %v2161 = vpop.f32.mrb[0].mxu0
        %v2162 = vadd.f32 %v2074, %v2161
        %v2163 = vpop.f32.mrb[0].mxu0
        %2164 = vdwg.mxu0
        %v2165 = vadd.f32 %v1884, %v2159
        %v2166 = vadd.f32 %v1885, %v2162
        %2167 = vst.msk [vmem:[#allocation2] sm:$0xff] %vm753, %v2165
        %2168 = vst.msk [vmem:[#allocation2 + $0x8] sm:$0xff] %vm753, %v2166
        %p2169 = scmp.eq.s32.totalorder %s33, 1
        // Predicated region
        $region89: #{tpu_custom_call.1} parent=83 // pred_check
          %p2170 = pneg %p2169
        $region90: #{tpu_custom_call.1} parent=83 // pred_check_branch
          %2172 = sbr.rel (%p2170) target = $region92
        $region91: #{tpu_custom_call.1} parent=83 // pred_region
          %v2173 = vld [vmem:[%s14] sm:$0x1]
          %v2174 = vld [vmem:[%s15] sm:$0x1]
          %v2175 = vsel %vm753, %v2165, 0.0
          %2176 = vadd.xlane.f32.xlu0 %v2175
          %v2177 = vpop.xlane.xlu0 %2176
          %v2178 = vsel %vm753, %v2166, 0.0
          %2179 = vadd.xlane.f32.xlu0 %v2178
          %v2180 = vpop.xlane.xlu0 %2179
          %v2181 = vmul.f32 %v2177, %v760
          %v2182 = vmul.f32 %v2180, %v760
          %v2183 = vsub.f32 %v2165, %v2181
          %v2184 = vsub.f32 %v2166, %v2182
          %v2185 = vmul.f32 %v2183, %v2183
          %v2186 = vmul.f32 %v2184, %v2184
          %v2187 = vsel %vm753, %v2185, 0.0
          %2188 = vadd.xlane.f32.xlu0 %v2187
          %v2189 = vpop.xlane.xlu0 %2188
          %v2190 = vsel %vm753, %v2186, 0.0
          %2191 = vadd.xlane.f32.xlu0 %v2190
          %v2192 = vpop.xlane.xlu0 %2191
          %v2193 = vmul.f32 %v2189, %v760
          %v2194 = vmul.f32 %v2192, %v760
          %v2195 = vadd.f32 %v2193, 1e-06
          %v2196 = vadd.f32 %v2194, 1e-06
          %v2197 = vrsqrt.pop %v2195
          %v2198 = vrsqrt.pop %v2196
          %v2199 = vmul.f32 %v2183, %v2197
          %v2200 = vmul.f32 %v2184, %v2198
          %v2202 = vlaneseq
          %v2203 = vshrl.u32 %v2202, 7
          %v2204 = vsub.s32 0, %v2203
          %v2205 = vrot.slane %v2173, %v2204
          %v2207 = vmul.f32 %v2199, %v2205
          %v2208 = vmul.f32 %v2200, %v2205
          %v2210 = vlaneseq
          %v2211 = vshrl.u32 %v2210, 7
          %v2212 = vsub.s32 0, %v2211
          %v2213 = vrot.slane %v2174, %v2212
          %v2215 = vadd.f32 %v2207, %v2213
          %v2216 = vadd.f32 %v2208, %v2213
          %2217 = vst.msk [vmem:[#allocation4] sm:$0xff] %vm753, %v2215
          %2218 = vst.msk [vmem:[#allocation4 + $0x8] sm:$0xff] %vm753, %v2216
        $region92: #{tpu_custom_call.1} parent=83 // pred_fallthru
          _
        // Predicated region
        $region93: #{tpu_custom_call.1} parent=83 // pred_check
          %p2219 = pneg %p464
        $region94: #{tpu_custom_call.1} parent=83 // pred_check_branch
          %2221 = sbr.rel (%p2219) target = $region96
        $region95: #{tpu_custom_call.1} parent=83 // pred_region
          %s2222 = smul.u32 2, %s32
          %s2224 = ssub.s32 256, 256
          %2225 = vsyncadd [#allocation5], %s2224
          %s2226 = smul.addr %s2222, 128
          %s2227 = scalar_lea.hbm %s16, %s2226
          %s2228 = sshll.u32 [#allocation4], 4
          %s2229 = int_to_ptr.vmem [resolvable:$true] %s2228
          %2234 = dma.vmem_to_hbm [thread:$0]  %s2229, 256, %s2227, [#allocation5], 128, 128, 8
        $region96: #{tpu_custom_call.1} parent=83 // pred_fallthru
          _
        // Predicated region
        $region97: #{tpu_custom_call.1} parent=83 // pred_check
          %p2235 = pneg %p464
        $region98: #{tpu_custom_call.1} parent=83 // pred_check_branch
          %2237 = sbr.rel (%p2235) target = $region100
        $region99: #{tpu_custom_call.1} parent=83 // pred_region
          %2238 = dma.done [#allocation5], 256
        $region100: #{tpu_custom_call.1} parent=83 // pred_fallthru
          _
      $region84: #{tpu_custom_call.1} parent=5 // pred_fallthru
        _
      %p2239 = scmp.le.s32.totalorder 2, %s23
      // Predicated region
      $region101: #{tpu_custom_call.1} parent=5 // pred_check
        %p2240 = pneg %p2239
      $region102: #{tpu_custom_call.1} parent=5 // pred_check_branch
        %2242 = sbr.rel (%p2240) target = $region104
      $region103: #{tpu_custom_call.1} parent=5 // pred_region
        %s2243 = ssub.s32 %s23, 2
      $region104: #{tpu_custom_call.1} parent=5 // pred_fallthru
        _
    $region6: #{tpu_custom_call.1} parent=1 // loop_footer
      %s27 = sadd.s32 1, %s23
    $region7: #{tpu_custom_call.1} parent=1 // loop_footer_branch
      %22 = sbr.rel target = $region3
    $region8: #{tpu_custom_call.1} parent=1 // loop_exit
      _
    %2244 = vsyncpa [#allocation5], 1
    %s2245 = scalar_lea.sflag [#allocation5], 1
    %2246 = vsyncpa %s2245, 1

</llo_original>
